<compile_context>
chip_gen: v7x
topology: tpu7x:2x2x1
jax: 0.10.0
libtpu: 0.0.40
codegen_flags: <defaults>
</compile_context>

<pallas_src>
import jax
import jax.numpy as jnp
from jax.experimental import pallas as pl
from jax.experimental.pallas import tpu as pltpu


def _make_kernel(D, fuse_out):
    def kernel(x_ref, ctx_ref, w_in_t_ref, w_out_t_ref, h_ref, attn_ref):
        x = x_ref[...]                                   # (Bt, D) compute dtype
        cd = x.dtype
        ctx_f32 = ctx_ref[...].astype(jnp.float32)       # (Bt, L, D) f32

        # target = linear_in(input): dense MXU matmul, f32 accumulation.
        target = jnp.dot(x, w_in_t_ref[...],
                         preferred_element_type=jnp.float32)        # (Bt, D)

        # Attention logits on the VPU (broadcast-multiply + lane reduction);
        # avoids the degenerate N=1 per-batch MXU matmul and size-1 squeezes.
        logits = jnp.sum(ctx_f32 * target[:, None, :], axis=-1)     # (Bt, L)

        # Numerically stable softmax over L; exact division (attn is a
        # user-visible output and must sum to 1 per row).
        m = jnp.max(logits, axis=-1, keepdims=True)
        e = jnp.exp(logits - m)
        attn = e / jnp.sum(e, axis=-1, keepdims=True)                # (Bt, L)

        # Weighted context on the VPU (sublane reduction over L).
        wctx = jnp.sum(attn[:, :, None] * ctx_f32, axis=1)           # (Bt, D)

        # h_tilde = tanh(linear_out(concat(wctx, input)))
        if fuse_out:
            # Single (Bt, 2D) @ (2D, D) MXU matmul (fills contraction depth).
            h_in = jnp.concatenate([wctx.astype(cd), x], axis=-1)
            h = jnp.dot(h_in, w_out_t_ref[...],
                        preferred_element_type=jnp.float32)
        else:
            h = jnp.dot(wctx.astype(cd), w_out_t_ref[:D, :],
                        preferred_element_type=jnp.float32)
            h = h + jnp.dot(x, w_out_t_ref[D:, :],
                            preferred_element_type=jnp.float32)

        h_ref[...] = jnp.tanh(h).astype(h_ref.dtype)
        attn_ref[...] = attn.astype(attn_ref.dtype)

    return kernel


def _vmem_capacity_bytes():
    """Physical VMEM bytes for the current generation (128 MiB on v5e/v6e,
    64 MiB on v7x).  Conservative fallback if the query is unavailable."""
    try:
        return int(pltpu.get_tpu_info().vmem_capacity_bytes)
    except Exception:
        return 64 * 1024 * 1024


def _pick_block_b(B, L, D, ctx_itemsize, cd_itemsize, ctx_buffers, budget_bytes):
    """Largest multiple-of-8 divisor of B whose pipelined working set fits
    `budget_bytes`, preferring >=2 grid steps (pipelining + v7x megacore)."""
    per_row = (2 * D * cd_itemsize                    # x tile (double-buffered)
               + ctx_buffers * L * D * ctx_itemsize   # context tiles
               + 2 * D * 4                            # h output (f32, 2 bufs)
               + 2 * L * 4)                           # attn output (f32, 2 bufs)
    if ctx_itemsize < 4:
        per_row += L * D * 4                          # in-kernel f32 ctx temp
    cap = max(8, budget_bytes // max(per_row, 1))

    best = None
    for cand in range(8, min(cap, B) + 1, 8):
        if B % cand == 0 and B // cand >= 2:
            best = cand
    if best is None:
        for cand in range(1, min(cap, B) + 1):
            if B % cand == 0:
                best = cand
    return best if best is not None else B


def soft_dot_attention(x, context, w_in, w_out, *, block_b=None,
                       compute_dtype=None, ctx_buffers=2,
                       single_buffer_weights=True):
    """x: (B, D), context: (B, L, D), w_in: (D, D), w_out: (D, 2D).

    Matches the PyTorch module: target = x @ w_in.T; attn = softmax over L of
    bmm(context, target); weighted_ctx = bmm(attn, context);
    h_tilde = tanh(cat(weighted_ctx, x) @ w_out.T).
    Returns (h_tilde (B, D) f32, attn (B, L) f32).

    `context` is consumed in its storage dtype (keep it bf16 at the caller to
    halve HBM traffic); MXU operands use `compute_dtype` (default x.dtype);
    softmax / reductions / tanh are f32.
    """
    B, D = x.shape
    Bc, L, Dc = context.shape
    assert (Bc, Dc) == (B, D)
    assert w_in.shape == (D, D) and w_out.shape == (D, 2 * D)

    cd = jnp.dtype(compute_dtype) if compute_dtype is not None else jnp.dtype(x.dtype)
    # Small operands: wrapper cast is cheap.  context is intentionally NOT cast.
    xc = x.astype(cd)
    w_in_t = jnp.transpose(w_in).astype(cd)        # (D, D)   == W_in.T
    w_out_t = jnp.transpose(w_out).astype(cd)      # (2D, D)  == W_out.T

    # Generation-aware VMEM budget.
    vmem_cap = _vmem_capacity_bytes()
    vmem_limit = max(32 * 1024 * 1024,
                     min((vmem_cap * 3) // 4, vmem_cap - 4 * 1024 * 1024))
    weight_bufs = 1 if single_buffer_weights else 2
    weight_bytes = 3 * D * D * cd.itemsize * weight_bufs
    budget = int(0.8 * vmem_limit) - weight_bytes

    if block_b is None or block_b <= 0 or B % block_b != 0:
        block_b = _pick_block_b(B, L, D, jnp.dtype(context.dtype).itemsize,
                                cd.itemsize, ctx_buffers, budget)
    grid = (B // block_b,)

    kernel = _make_kernel(D, fuse_out=(D <= 128))

    def _run(single_w):
        def wspec(shape):
            if single_w:
                return pl.BlockSpec(shape, lambda i: (0, 0),
                                    pipeline_mode=pl.Buffered(1))
            return pl.BlockSpec(shape, lambda i: (0, 0))

        ctx_kwargs = {}
        if ctx_buffers != 2:
            ctx_kwargs["pipeline_mode"] = pl.Buffered(ctx_buffers)

        in_specs = [
            pl.BlockSpec((block_b, D), lambda i: (i, 0)),
            pl.BlockSpec((block_b, L, D), lambda i: (i, 0, 0), **ctx_kwargs),
            wspec((D, D)),
            wspec((2 * D, D)),
        ]
        out_specs = (
            pl.BlockSpec((block_b, D), lambda i: (i, 0)),
            pl.BlockSpec((block_b, L), lambda i: (i, 0)),
        )
        return pl.pallas_call(
            kernel,
            grid=grid,
            in_specs=in_specs,
            out_specs=out_specs,
            out_shape=(
                jax.ShapeDtypeStruct((B, D), jnp.float32),
                jax.ShapeDtypeStruct((B, L), jnp.float32),
            ),
            compiler_params=pltpu.CompilerParams(
                dimension_semantics=("parallel",),
                vmem_limit_bytes=int(vmem_limit),
            ),
        )(xc, context, w_in_t, w_out_t)

    if single_buffer_weights:
        try:
            return _run(True)
        except Exception:
            # Older JAX without BlockSpec(pipeline_mode=...): fall back to the
            # default double-buffered weight specs.
            pass
    return _run(False)


def _reference(x, context, w_in, w_out, compute_dtype=None):
    """Pure-JAX reference mirroring the PyTorch forward (ctx upcast to f32 for
    the per-batch contractions, compute_dtype operands for the dense matmuls
    with f32 accumulation -- same recipe as the kernel)."""
    D = x.shape[-1]
    cd = jnp.dtype(compute_dtype) if compute_dtype is not None else jnp.dtype(x.dtype)
    xc = x.astype(cd)
    w_in_t = jnp.transpose(w_in).astype(cd)
    w_out_t = jnp.transpose(w_out).astype(cd)
    ctx_f = context.astype(jnp.float32)

    target = jnp.dot(xc, w_in_t, preferred_element_type=jnp.float32)
    logits = jnp.einsum('bld,bd->bl', ctx_f, target)
    attn = jax.nn.softmax(logits, axis=-1)
    wctx = jnp.einsum('bl,bld->bd', attn, ctx_f)
    h_in = jnp.concatenate([wctx.astype(cd), xc], axis=-1)
    h = jnp.dot(h_in, w_out_t, preferred_element_type=jnp.float32)
    return jnp.tanh(h), attn


if __name__ == "__main__":
    B, L, D = 32, 8, 32

    key = jax.random.PRNGKey(0)
    k_x, k_ctx, k_win, k_wout = jax.random.split(key, 4)

    x = jax.random.normal(k_x, (B, D), dtype=jnp.float32)
    context = jax.random.normal(k_ctx, (B, L, D), dtype=jnp.float32)
    # Deterministic parameters (shapes from nn.Linear in __init__, bias=False).
    w_in = jax.random.normal(k_win, (D, D), dtype=jnp.float32) * 0.1
    w_out = jax.random.normal(k_wout, (D, 2 * D), dtype=jnp.float32) * 0.1

    # f32 path (matches the PyTorch module); auto block_b -> 16 => 2 grid steps.
    h_tilde, attn = soft_dot_attention(x, context, w_in, w_out)
    jax.block_until_ready((h_tilde, attn))
    h_ref, attn_ref = _reference(x, context, w_in, w_out)
    assert jnp.allclose(h_tilde, h_ref, atol=5e-3, rtol=5e-3)
    assert jnp.allclose(attn, attn_ref, atol=5e-3, rtol=5e-3)
    assert jnp.allclose(jnp.sum(attn, axis=-1), 1.0, atol=1e-5)

    # bf16-storage path: the CALLER keeps x/context in bf16 (halves HBM
    # traffic for this ctx-read-bound kernel); softmax/tanh remain f32.
    x_bf = x.astype(jnp.bfloat16)
    ctx_bf = context.astype(jnp.bfloat16)
    h_bf, attn_bf = soft_dot_attention(x_bf, ctx_bf, w_in, w_out)
    jax.block_until_ready((h_bf, attn_bf))
    h_ref_bf, attn_ref_bf = _reference(x_bf, ctx_bf, w_in, w_out)
    assert jnp.allclose(h_bf, h_ref_bf, atol=1e-2, rtol=1e-2)
    assert jnp.allclose(attn_bf, attn_ref_bf, atol=1e-2, rtol=1e-2)

    print("KERNEL_OK")
</pallas_src>

<mosaic_0001>
module attributes {stable_mosaic.version = 11 : i64} {
  func.func @kernel(%arg0: i32, %arg1: memref<16x32xf32, #tpu.memory_space<vmem>>, %arg2: memref<16x8x32xf32, #tpu.memory_space<vmem>>, %arg3: memref<32x32xf32, #tpu.memory_space<vmem>>, %arg4: memref<64x32xf32, #tpu.memory_space<vmem>>, %arg5: memref<16x32xf32, #tpu.memory_space<vmem>>, %arg6: memref<16x8xf32, #tpu.memory_space<vmem>>) attributes {dimension_semantics = [#tpu.dimension_semantics<parallel>], iteration_bounds = array<i64: 2>, scalar_prefetch = 0 : i64, scratch_operands = 0 : i64, tpu.core_type = #tpu.core_type<tc>, window_params = [{transform_indices = @transform_0, window_bounds = array<i64: 16, 32>}, {transform_indices = @transform_1, window_bounds = array<i64: 16, 8, 32>}, {pipeline_mode = #tpu.pipeline_mode<synchronous>, transform_indices = @transform_2, window_bounds = array<i64: 32, 32>}, {pipeline_mode = #tpu.pipeline_mode<synchronous>, transform_indices = @transform_3, window_bounds = array<i64: 64, 32>}, {transform_indices = @transform_4, window_bounds = array<i64: 16, 32>}, {transform_indices = @transform_5, window_bounds = array<i64: 16, 8>}]} {
    %c0 = arith.constant 0 : index
    %c0_0 = arith.constant 0 : index
    %0 = vector.load %arg1[%c0, %c0_0] : memref<16x32xf32, #tpu.memory_space<vmem>>, vector<16x32xf32>
    %c0_1 = arith.constant 0 : index
    %c0_2 = arith.constant 0 : index
    %c0_3 = arith.constant 0 : index
    %1 = vector.load %arg2[%c0_1, %c0_2, %c0_3] : memref<16x8x32xf32, #tpu.memory_space<vmem>>, vector<16x8x32xf32>
    %c0_4 = arith.constant 0 : index
    %c0_5 = arith.constant 0 : index
    %2 = vector.load %arg3[%c0_4, %c0_5] : memref<32x32xf32, #tpu.memory_space<vmem>>, vector<32x32xf32>
    %cst = arith.constant dense<0.000000e+00> : vector<16x32xf32>
    %3 = tpu.matmul %0, %2, %cst {dimension_numbers = #tpu.dot_dimension_numbers<[1], [0], [0], [1], [0, 0, 1, 1], [], []>} : vector<16x32xf32>, vector<32x32xf32>, vector<16x32xf32> -> vector<16x32xf32>
    %4 = vector.shape_cast %3 : vector<16x32xf32> to vector<16x1x32xf32>
    %5 = vector.broadcast %4 : vector<16x1x32xf32> to vector<16x8x32xf32>
    %6 = arith.mulf %1, %5 : vector<16x8x32xf32>
    %cst_6 = arith.constant dense<0.000000e+00> : vector<16x8xf32>
    %7 = vector.multi_reduction <add>, %6, %cst_6 [2] : vector<16x8x32xf32> to vector<16x8xf32>
    %cst_7 = arith.constant dense<0xFF800000> : vector<16xf32>
    %8 = vector.multi_reduction <maximumf>, %7, %cst_7 [1] : vector<16x8xf32> to vector<16xf32>
    %9 = vector.shape_cast %8 : vector<16xf32> to vector<16x1xf32>
    %10 = vector.broadcast %9 : vector<16x1xf32> to vector<16x8xf32>
    %11 = arith.subf %7, %10 : vector<16x8xf32>
    %12 = math.exp %11 : vector<16x8xf32>
    %cst_8 = arith.constant dense<0.000000e+00> : vector<16xf32>
    %13 = vector.multi_reduction <add>, %12, %cst_8 [1] : vector<16x8xf32> to vector<16xf32>
    %14 = vector.shape_cast %13 : vector<16xf32> to vector<16x1xf32>
    %15 = vector.broadcast %14 : vector<16x1xf32> to vector<16x8xf32>
    %16 = arith.divf %12, %15 : vector<16x8xf32>
    %17 = vector.shape_cast %16 : vector<16x8xf32> to vector<16x8x1xf32>
    %18 = vector.broadcast %17 : vector<16x8x1xf32> to vector<16x8x32xf32>
    %19 = arith.mulf %18, %1 : vector<16x8x32xf32>
    %cst_9 = arith.constant dense<0.000000e+00> : vector<16x32xf32>
    %20 = vector.multi_reduction <add>, %19, %cst_9 [1] : vector<16x8x32xf32> to vector<16x32xf32>
    %21 = tpu.concatenate %20, %0 in 1 : vector<16x32xf32>, vector<16x32xf32> -> vector<16x64xf32>
    %c0_10 = arith.constant 0 : index
    %c0_11 = arith.constant 0 : index
    %22 = vector.load %arg4[%c0_10, %c0_11] : memref<64x32xf32, #tpu.memory_space<vmem>>, vector<64x32xf32>
    %cst_12 = arith.constant dense<0.000000e+00> : vector<16x32xf32>
    %23 = tpu.matmul %21, %22, %cst_12 {dimension_numbers = #tpu.dot_dimension_numbers<[1], [0], [0], [1], [0, 0, 1, 1], [], []>} : vector<16x64xf32>, vector<64x32xf32>, vector<16x32xf32> -> vector<16x32xf32>
    %24 = math.tanh %23 : vector<16x32xf32>
    %c0_13 = arith.constant 0 : index
    %c0_14 = arith.constant 0 : index
    %25 = vector.load %arg5[%c0_13, %c0_14] : memref<16x32xf32, #tpu.memory_space<vmem>>, vector<16x32xf32>
    tpu.vector_store %arg5[%c0_13, %c0_14], %24 {strides = array<i32>} : memref<16x32xf32, #tpu.memory_space<vmem>>, vector<16x32xf32>,
    %c0_15 = arith.constant 0 : index
    %c0_16 = arith.constant 0 : index
    %26 = vector.load %arg6[%c0_15, %c0_16] : memref<16x8xf32, #tpu.memory_space<vmem>>, vector<16x8xf32>
    tpu.vector_store %arg6[%c0_15, %c0_16], %16 {strides = array<i32>} : memref<16x8xf32, #tpu.memory_space<vmem>>, vector<16x8xf32>,
    return
  }
  func.func @transform_0(%arg0: i32) -> (i32, i32) {
    %c0_i32 = arith.constant 0 : i32
    %c0_i32_0 = arith.constant 0 : i32
    return %arg0, %c0_i32 : i32, i32
  }
  func.func @transform_1(%arg0: i32) -> (i32, i32, i32) {
    %c0_i32 = arith.constant 0 : i32
    %c0_i32_0 = arith.constant 0 : i32
    %c0_i32_1 = arith.constant 0 : i32
    return %arg0, %c0_i32, %c0_i32_0 : i32, i32, i32
  }
  func.func @transform_2(%arg0: i32) -> (i32, i32) {
    %c0_i32 = arith.constant 0 : i32
    %c0_i32_0 = arith.constant 0 : i32
    %c0_i32_1 = arith.constant 0 : i32
    return %c0_i32, %c0_i32_0 : i32, i32
  }
  func.func @transform_3(%arg0: i32) -> (i32, i32) {
    %c0_i32 = arith.constant 0 : i32
    %c0_i32_0 = arith.constant 0 : i32
    %c0_i32_1 = arith.constant 0 : i32
    return %c0_i32, %c0_i32_0 : i32, i32
  }
  func.func @transform_4(%arg0: i32) -> (i32, i32) {
    %c0_i32 = arith.constant 0 : i32
    %c0_i32_0 = arith.constant 0 : i32
    return %arg0, %c0_i32 : i32, i32
  }
  func.func @transform_5(%arg0: i32) -> (i32, i32) {
    %c0_i32 = arith.constant 0 : i32
    %c0_i32_0 = arith.constant 0 : i32
    return %arg0, %c0_i32 : i32, i32
  }
}

module attributes {stable_mosaic.version = 11 : i64} {
  func.func @kernel(%arg0: i32, %arg1: memref<16x32xf32, #tpu.memory_space<vmem>>, %arg2: memref<16x8x32xf32, #tpu.memory_space<vmem>>, %arg3: memref<32x32xf32, #tpu.memory_space<vmem>>, %arg4: memref<64x32xf32, #tpu.memory_space<vmem>>, %arg5: memref<16x32xf32, #tpu.memory_space<vmem>>, %arg6: memref<16x8xf32, #tpu.memory_space<vmem>>) attributes {dimension_semantics = [#tpu.dimension_semantics<parallel>], iteration_bounds = array<i64: 2>, scalar_prefetch = 0 : i64, scratch_operands = 0 : i64, tpu.core_type = #tpu.core_type<tc>, window_params = [{transform_indices = @transform_0, window_bounds = array<i64: 16, 32>}, {transform_indices = @transform_1, window_bounds = array<i64: 16, 8, 32>}, {pipeline_mode = #tpu.pipeline_mode<synchronous>, transform_indices = @transform_2, window_bounds = array<i64: 32, 32>}, {pipeline_mode = #tpu.pipeline_mode<synchronous>, transform_indices = @transform_3, window_bounds = array<i64: 64, 32>}, {transform_indices = @transform_4, window_bounds = array<i64: 16, 32>}, {transform_indices = @transform_5, window_bounds = array<i64: 16, 8>}]} {
    %c0 = arith.constant 0 : index
    %c0_0 = arith.constant 0 : index
    %0 = vector.load %arg1[%c0, %c0_0] : memref<16x32xf32, #tpu.memory_space<vmem>>, vector<16x32xf32>
    %c0_1 = arith.constant 0 : index
    %c0_2 = arith.constant 0 : index
    %c0_3 = arith.constant 0 : index
    %1 = vector.load %arg2[%c0_1, %c0_2, %c0_3] : memref<16x8x32xf32, #tpu.memory_space<vmem>>, vector<16x8x32xf32>
    %c0_4 = arith.constant 0 : index
    %c0_5 = arith.constant 0 : index
    %2 = vector.load %arg3[%c0_4, %c0_5] : memref<32x32xf32, #tpu.memory_space<vmem>>, vector<32x32xf32>
    %cst = arith.constant dense<0.000000e+00> : vector<16x32xf32>
    %3 = tpu.matmul %0, %2, %cst {dimension_numbers = #tpu.dot_dimension_numbers<[1], [0], [0], [1], [0, 0, 1, 1], [], []>} : vector<16x32xf32>, vector<32x32xf32>, vector<16x32xf32> -> vector<16x32xf32>
    %4 = vector.shape_cast %3 : vector<16x32xf32> to vector<16x1x32xf32>
    %5 = vector.broadcast %4 : vector<16x1x32xf32> to vector<16x8x32xf32>
    %6 = arith.mulf %1, %5 : vector<16x8x32xf32>
    %cst_6 = arith.constant dense<0.000000e+00> : vector<16x8xf32>
    %7 = vector.multi_reduction <add>, %6, %cst_6 [2] : vector<16x8x32xf32> to vector<16x8xf32>
    %cst_7 = arith.constant dense<0xFF800000> : vector<16xf32>
    %8 = vector.multi_reduction <maximumf>, %7, %cst_7 [1] : vector<16x8xf32> to vector<16xf32>
    %9 = vector.shape_cast %8 : vector<16xf32> to vector<16x1xf32>
    %10 = vector.broadcast %9 : vector<16x1xf32> to vector<16x8xf32>
    %11 = arith.subf %7, %10 : vector<16x8xf32>
    %12 = math.exp %11 : vector<16x8xf32>
    %cst_8 = arith.constant dense<0.000000e+00> : vector<16xf32>
    %13 = vector.multi_reduction <add>, %12, %cst_8 [1] : vector<16x8xf32> to vector<16xf32>
    %14 = vector.shape_cast %13 : vector<16xf32> to vector<16x1xf32>
    %15 = vector.broadcast %14 : vector<16x1xf32> to vector<16x8xf32>
    %16 = arith.divf %12, %15 : vector<16x8xf32>
    %17 = vector.shape_cast %16 : vector<16x8xf32> to vector<16x8x1xf32>
    %18 = vector.broadcast %17 : vector<16x8x1xf32> to vector<16x8x32xf32>
    %19 = arith.mulf %18, %1 : vector<16x8x32xf32>
    %cst_9 = arith.constant dense<0.000000e+00> : vector<16x32xf32>
    %20 = vector.multi_reduction <add>, %19, %cst_9 [1] : vector<16x8x32xf32> to vector<16x32xf32>
    %21 = tpu.concatenate %20, %0 in 1 : vector<16x32xf32>, vector<16x32xf32> -> vector<16x64xf32>
    %c0_10 = arith.constant 0 : index
    %c0_11 = arith.constant 0 : index
    %22 = vector.load %arg4[%c0_10, %c0_11] : memref<64x32xf32, #tpu.memory_space<vmem>>, vector<64x32xf32>
    %cst_12 = arith.constant dense<0.000000e+00> : vector<16x32xf32>
    %23 = tpu.matmul %21, %22, %cst_12 {dimension_numbers = #tpu.dot_dimension_numbers<[1], [0], [0], [1], [0, 0, 1, 1], [], []>} : vector<16x64xf32>, vector<64x32xf32>, vector<16x32xf32> -> vector<16x32xf32>
    %24 = math.tanh %23 : vector<16x32xf32>
    %c0_13 = arith.constant 0 : index
    %c0_14 = arith.constant 0 : index
    %25 = vector.load %arg5[%c0_13, %c0_14] : memref<16x32xf32, #tpu.memory_space<vmem>>, vector<16x32xf32>
    tpu.vector_store %arg5[%c0_13, %c0_14], %24 {strides = array<i32>} : memref<16x32xf32, #tpu.memory_space<vmem>>, vector<16x32xf32>,
    %c0_15 = arith.constant 0 : index
    %c0_16 = arith.constant 0 : index
    %26 = vector.load %arg6[%c0_15, %c0_16] : memref<16x8xf32, #tpu.memory_space<vmem>>, vector<16x8xf32>
    tpu.vector_store %arg6[%c0_15, %c0_16], %16 {strides = array<i32>} : memref<16x8xf32, #tpu.memory_space<vmem>>, vector<16x8xf32>,
    return
  }
  func.func @transform_0(%arg0: i32) -> (i32, i32) {
    %c0_i32 = arith.constant 0 : i32
    %c0_i32_0 = arith.constant 0 : i32
    return %arg0, %c0_i32 : i32, i32
  }
  func.func @transform_1(%arg0: i32) -> (i32, i32, i32) {
    %c0_i32 = arith.constant 0 : i32
    %c0_i32_0 = arith.constant 0 : i32
    %c0_i32_1 = arith.constant 0 : i32
    return %arg0, %c0_i32, %c0_i32_0 : i32, i32, i32
  }
  func.func @transform_2(%arg0: i32) -> (i32, i32) {
    %c0_i32 = arith.constant 0 : i32
    %c0_i32_0 = arith.constant 0 : i32
    %c0_i32_1 = arith.constant 0 : i32
    return %c0_i32, %c0_i32_0 : i32, i32
  }
  func.func @transform_3(%arg0: i32) -> (i32, i32) {
    %c0_i32 = arith.constant 0 : i32
    %c0_i32_0 = arith.constant 0 : i32
    %c0_i32_1 = arith.constant 0 : i32
    return %c0_i32, %c0_i32_0 : i32, i32
  }
  func.func @transform_4(%arg0: i32) -> (i32, i32) {
    %c0_i32 = arith.constant 0 : i32
    %c0_i32_0 = arith.constant 0 : i32
    return %arg0, %c0_i32 : i32, i32
  }
  func.func @transform_5(%arg0: i32) -> (i32, i32) {
    %c0_i32 = arith.constant 0 : i32
    %c0_i32_0 = arith.constant 0 : i32
    return %arg0, %c0_i32 : i32, i32
  }
}

</mosaic_0001>

<llo_original>
// kernel: tpu_custom_call.1
$region0: #{tpu_custom_call.1}
  #allocation0 [shape = 'u32[]', space=smem, size = 0x4, offset = 0x4, fixed_abs, tag = 'smem constant byte address 0x4 - core index']
  #allocation1 [shape = 'u32[144,128]{1,0:T(1,128)}', space=vmem, size = 0x12000, scoped, tag = 'internal scratch']
  %s0 = inlined_call_operand.vmem [shape: f32[32,32], index: 0, kind: input, shape index: {}]
  %s1 = inlined_call_operand.hbm [shape: f32[32,8,32], index: 1, kind: input, shape index: {}]
  %s2 = inlined_call_operand.vmem [shape: f32[32,32], index: 2, kind: input, shape index: {}]
  %s3 = inlined_call_operand.vmem [shape: f32[64,32], index: 3, kind: input, shape index: {}]
  %s4 = inlined_call_operand.hbm [shape: f32[32,32], index: 4, kind: output, shape index: {0}]
  %s5 = inlined_call_operand.vmem [shape: f32[32,8], index: 5, kind: output, shape index: {1}]
  %6 = xla_tuple %s4, %s5
  %s7 = sld [smem:[#allocation0]]
  $region61: #{tpu_custom_call.1} parent=0
    _
  %s9 = ssub.s32 1, %s7
  %s10 = scalar_select 0, %s9, %s7
  $region1: #{tpu_custom_call.1} parent=0
    #allocation2 [shape = 'u8[131072]{0}', space=vmem, size = 0x20000, scoped, tag = 'input window, operand 1']
    #allocation3 [shape = 's32[2]{0}', space=sflag, size = 0x8, scoped, tag = 'scoped memory for tpu_custom_call.1']
    #allocation4 [shape = 's32[2]{0}', space=sflag, size = 0x8, scoped, tag = 'scoped memory for tpu_custom_call.1']
    #allocation5 [shape = 'u8[16384]{0}', space=vmem, size = 0x4000, scoped, tag = 'output window, operand 0']
    %11 = vsyncpa [#allocation3], 0
    %s12 = scalar_lea.sflag [#allocation3], 1
    %13 = vsyncpa %s12, 0
    %14 = vsyncpa [#allocation4], 0
    %s15 = scalar_lea.sflag [#allocation4], 1
    %16 = vsyncpa %s15, 0
    loop: start=0, step=1, limit=4
    $region2: #{tpu_custom_call.1} parent=1 // loop_pre_header
      _
    $region3: #{tpu_custom_call.1} parent=1 // loop_header
      %s18 = sphi 0, %s22
      %p19 = scmp.ge.s32.totalorder %s18, 4
      %s28 = sphi 0, %s30
      %s31 = sphi 0, %s28
      %s32 = sphi 0, %s31
      %s48 = sphi 0, %s32
      %s54 = sphi 0, %s56
      %s57 = sphi 0, %s54
      %s58 = sphi 0, %s57
      %s74 = sphi 0, %s58
      %s78 = sphi 0, %s78
      %s80 = sphi 0, %s78
      %s81 = sphi 0, %s80
      %s95 = sphi 0, %s81
      %s99 = sphi 0, %s99
      %s101 = sphi 0, %s99
      %s102 = sphi 0, %s101
      %s116 = sphi 0, %s102
      %s122 = sphi 0, %s124
      %s125 = sphi 0, %s122
      %s126 = sphi 0, %s125
      %s142 = sphi 0, %s126
      %s148 = sphi 0, %s150
      %s151 = sphi 0, %s148
      %s152 = sphi 0, %s151
      %s168 = sphi 0, %s152
    $region4: #{tpu_custom_call.1} parent=1 // loop_header_branch
      %21 = sbr.rel (%p19) target = $region8
    $region5: #{tpu_custom_call.1} parent=1 // loop_body
      %s23 = ssub.s32 %s18, 1
      %s24 = ssub.s32 %s18, 2
      %s25 = sadd.s32 %s18, 1
      %s26 = ssub.s32 %s18, %s25
      %p27 = scmp.eq.s32.totalorder %s26, 0
      %s29 = sadd.s32 %s28, 1
      %s30 = scalar_select %p27, %s28, %s29
      %p33 = pneg %p27
      %p34 = scmp.eq.s32.totalorder %s18, 1
      %p35 = por %p33, %p34
      %p36 = scmp.ne.s32.totalorder %s28, %s31
      %p37 = scmp.eq.s32.totalorder %s18, 0
      %p38 = por %p36, %p37
      %p39 = scmp.ne.s32.totalorder %s28, %s31
      %p40 = scmp.eq.s32.totalorder %s23, 1
      %p41 = por %p39, %p40
      %p42 = scmp.ne.s32.totalorder %s31, %s32
      %p43 = scmp.eq.s32.totalorder %s23, 0
      %p44 = por %p42, %p43
      %p45 = scmp.ne.s32.totalorder %s31, %s32
      %p46 = scmp.eq.s32.totalorder %s24, 1
      %p47 = por %p45, %p46
      %p49 = scmp.ne.s32.totalorder %s32, %s48
      %p50 = scmp.eq.s32.totalorder %s24, 0
      %p51 = por %p49, %p50
      %s52 = ssub.s32 %s18, %s25
      %p53 = scmp.eq.s32.totalorder %s52, 0
      %s55 = sadd.s32 %s54, 1
      %s56 = scalar_select %p53, %s54, %s55
      %p59 = pneg %p53
      %p60 = scmp.eq.s32.totalorder %s18, 1
      %p61 = por %p59, %p60
      %p62 = scmp.ne.s32.totalorder %s54, %s57
      %p63 = scmp.eq.s32.totalorder %s18, 0
      %p64 = por %p62, %p63
      %p65 = scmp.ne.s32.totalorder %s54, %s57
      %p66 = scmp.eq.s32.totalorder %s23, 1
      %p67 = por %p65, %p66
      %p68 = scmp.ne.s32.totalorder %s57, %s58
      %p69 = scmp.eq.s32.totalorder %s23, 0
      %p70 = por %p68, %p69
      %p71 = scmp.ne.s32.totalorder %s57, %s58
      %p72 = scmp.eq.s32.totalorder %s24, 1
      %p73 = por %p71, %p72
      %p75 = scmp.ne.s32.totalorder %s58, %s74
      %p76 = scmp.eq.s32.totalorder %s24, 0
      %p77 = por %p75, %p76
      %s79 = sadd.s32 %s78, 1
      %p82 = scmp.eq.s32.totalorder %s18, 1
      %p83 = scmp.ne.s32.totalorder %s78, %s80
      %p84 = scmp.eq.s32.totalorder %s18, 0
      %p85 = por %p83, %p84
      %p86 = scmp.ne.s32.totalorder %s78, %s80
      %p87 = scmp.eq.s32.totalorder %s23, 1
      %p88 = por %p86, %p87
      %p89 = scmp.ne.s32.totalorder %s80, %s81
      %p90 = scmp.eq.s32.totalorder %s23, 0
      %p91 = por %p89, %p90
      %p92 = scmp.ne.s32.totalorder %s80, %s81
      %p93 = scmp.eq.s32.totalorder %s24, 1
      %p94 = por %p92, %p93
      %p96 = scmp.ne.s32.totalorder %s81, %s95
      %p97 = scmp.eq.s32.totalorder %s24, 0
      %p98 = por %p96, %p97
      %s100 = sadd.s32 %s99, 1
      %p103 = scmp.eq.s32.totalorder %s18, 1
      %p104 = scmp.ne.s32.totalorder %s99, %s101
      %p105 = scmp.eq.s32.totalorder %s18, 0
      %p106 = por %p104, %p105
      %p107 = scmp.ne.s32.totalorder %s99, %s101
      %p108 = scmp.eq.s32.totalorder %s23, 1
      %p109 = por %p107, %p108
      %p110 = scmp.ne.s32.totalorder %s101, %s102
      %p111 = scmp.eq.s32.totalorder %s23, 0
      %p112 = por %p110, %p111
      %p113 = scmp.ne.s32.totalorder %s101, %s102
      %p114 = scmp.eq.s32.totalorder %s24, 1
      %p115 = por %p113, %p114
      %p117 = scmp.ne.s32.totalorder %s102, %s116
      %p118 = scmp.eq.s32.totalorder %s24, 0
      %p119 = por %p117, %p118
      %s120 = ssub.s32 %s18, %s25
      %p121 = scmp.eq.s32.totalorder %s120, 0
      %s123 = sadd.s32 %s122, 1
      %s124 = scalar_select %p121, %s122, %s123
      %p127 = pneg %p121
      %p128 = scmp.eq.s32.totalorder %s18, 1
      %p129 = por %p127, %p128
      %p130 = scmp.ne.s32.totalorder %s122, %s125
      %p131 = scmp.eq.s32.totalorder %s18, 0
      %p132 = por %p130, %p131
      %p133 = scmp.ne.s32.totalorder %s122, %s125
      %p134 = scmp.eq.s32.totalorder %s23, 1
      %p135 = por %p133, %p134
      %p136 = scmp.ne.s32.totalorder %s125, %s126
      %p137 = scmp.eq.s32.totalorder %s23, 0
      %p138 = por %p136, %p137
      %p139 = scmp.ne.s32.totalorder %s125, %s126
      %p140 = scmp.eq.s32.totalorder %s24, 1
      %p141 = por %p139, %p140
      %p143 = scmp.ne.s32.totalorder %s126, %s142
      %p144 = scmp.eq.s32.totalorder %s24, 0
      %p145 = por %p143, %p144
      %s146 = ssub.s32 %s18, %s25
      %p147 = scmp.eq.s32.totalorder %s146, 0
      %s149 = sadd.s32 %s148, 1
      %s150 = scalar_select %p147, %s148, %s149
      %p153 = pneg %p147
      %p154 = scmp.eq.s32.totalorder %s18, 1
      %p155 = por %p153, %p154
      %p156 = scmp.ne.s32.totalorder %s148, %s151
      %p157 = scmp.eq.s32.totalorder %s18, 0
      %p158 = por %p156, %p157
      %p159 = scmp.ne.s32.totalorder %s148, %s151
      %p160 = scmp.eq.s32.totalorder %s23, 1
      %p161 = por %p159, %p160
      %p162 = scmp.ne.s32.totalorder %s151, %s152
      %p163 = scmp.eq.s32.totalorder %s23, 0
      %p164 = por %p162, %p163
      %p165 = scmp.ne.s32.totalorder %s151, %s152
      %p166 = scmp.eq.s32.totalorder %s24, 1
      %p167 = por %p165, %p166
      %p169 = scmp.ne.s32.totalorder %s152, %s168
      %p170 = scmp.eq.s32.totalorder %s24, 0
      %p171 = por %p169, %p170
      %p172 = scmp.le.s32.totalorder 1, %s18
      %p173 = scmp.lt.s32.totalorder %s18, 3
      %p174 = pnand %p172, %p173
      %p175 = pneg %p174
      // Predicated region
      $region9: #{tpu_custom_call.1} parent=5 // pred_check
        _
      $region10: #{tpu_custom_call.1} parent=5 // pred_check_branch
        %177 = sbr.rel (%p174) target = $region12
      $region11: #{tpu_custom_call.1} parent=5 // pred_region
        %s178 = ssub.s32 %s18, 1
        // Predicated region
        $region13: #{tpu_custom_call.1} parent=11 // pred_check
          %p179 = pneg %p91
        $region14: #{tpu_custom_call.1} parent=11 // pred_check_branch
          %181 = sbr.rel (%p179) target = $region16
        $region15: #{tpu_custom_call.1} parent=11 // pred_region
          _
        $region16: #{tpu_custom_call.1} parent=11 // pred_fallthru
          _
        // Predicated region
        $region17: #{tpu_custom_call.1} parent=11 // pred_check
          %p182 = pneg %p112
        $region18: #{tpu_custom_call.1} parent=11 // pred_check_branch
          %184 = sbr.rel (%p182) target = $region20
        $region19: #{tpu_custom_call.1} parent=11 // pred_region
          _
        $region20: #{tpu_custom_call.1} parent=11 // pred_fallthru
          _
      $region12: #{tpu_custom_call.1} parent=5 // pred_fallthru
        _
      %p185 = scmp.lt.s32.totalorder %s18, 2
      // Predicated region
      $region21: #{tpu_custom_call.1} parent=5 // pred_check
        %p186 = pneg %p185
      $region22: #{tpu_custom_call.1} parent=5 // pred_check_branch
        %188 = sbr.rel (%p186) target = $region24
      $region23: #{tpu_custom_call.1} parent=5 // pred_region
        // Predicated region
        $region25: #{tpu_custom_call.1} parent=23 // pred_check
          %p189 = pneg %p38
        $region26: #{tpu_custom_call.1} parent=23 // pred_check_branch
          %191 = sbr.rel (%p189) target = $region28
        $region27: #{tpu_custom_call.1} parent=23 // pred_region
          %s192 = smul.u32 2, %s18
          %p193 = scmp.lt.s32.totalorder %s192, 3
          %s194 = scalar_select %p193, %s192, 3
          %s195 = smul.addr %s194, 8
          %s196 = scalar_lea.vmem %s0, %s195
          %s197 = smul.u32 2, %s18
        $region28: #{tpu_custom_call.1} parent=23 // pred_fallthru
          _
        // Predicated region
        $region29: #{tpu_custom_call.1} parent=23 // pred_check
          %p198 = pneg %p64
        $region30: #{tpu_custom_call.1} parent=23 // pred_check_branch
          %200 = sbr.rel (%p198) target = $region32
        $region31: #{tpu_custom_call.1} parent=23 // pred_region
          %s201 = sand.u32 %s54, 1
          %s202 = scalar_lea.sflag [#allocation3], %s201
          %s203 = sand.u32 %s54, 1
          %s204 = smul.addr %s203, 128
          %s205 = scalar_lea.vmem [#allocation2], %s204
          %s206 = smul.u32 16, %s18
          %s208 = ssub.s32 2048, 2048
          %209 = vsyncadd %s202, %s208
          %s210 = smul.addr %s206, 128
          %s211 = scalar_lea.hbm %s1, %s210
          %s212 = sshll.u32 %s205, 4
          %s213 = int_to_ptr.vmem [resolvable:$true] %s212
          %218 = dma.hbm_to_vmem [thread:$0]  %s211, 2048, %s213, %s202, 128, 128, 8
        $region32: #{tpu_custom_call.1} parent=23 // pred_fallthru
          _
      $region24: #{tpu_custom_call.1} parent=5 // pred_fallthru
        _
      %p219 = scmp.le.s32.totalorder 1, %s18
      %p220 = scmp.lt.s32.totalorder %s18, 3
      %p221 = pnand %p219, %p220
      %p222 = pneg %p221
      // Predicated region
      $region33: #{tpu_custom_call.1} parent=5 // pred_check
        _
      $region34: #{tpu_custom_call.1} parent=5 // pred_check_branch
        %224 = sbr.rel (%p221) target = $region36
      $region35: #{tpu_custom_call.1} parent=5 // pred_region
        %s225 = ssub.s32 %s18, 1
        %s226 = sand.u32 %s57, 1
        %s227 = scalar_lea.sflag [#allocation3], %s226
        %s228 = sand.u32 %s57, 1
        %s229 = smul.addr %s228, 128
        %s230 = scalar_lea.vmem [#allocation2], %s229
        // Predicated region
        $region37: #{tpu_custom_call.1} parent=35 // pred_check
          %p231 = pneg %p70
        $region38: #{tpu_custom_call.1} parent=35 // pred_check_branch
          %233 = sbr.rel (%p231) target = $region40
        $region39: #{tpu_custom_call.1} parent=35 // pred_region
          %234 = dma.done %s227, 2048
        $region40: #{tpu_custom_call.1} parent=35 // pred_fallthru
          _
        %s235 = smul.u32 2, %s23
        %p236 = scmp.lt.s32.totalorder %s235, 3
        %s237 = scalar_select %p236, %s235, 3
        %s238 = smul.addr %s237, 8
        %s239 = scalar_lea.vmem %s0, %s238
        %p240 = pneg %p44
        %p241 = pneg %p41
        %s242 = sand.u32 %s57, 1
        %s243 = scalar_lea.sflag [#allocation3], %s242
        %s244 = sand.u32 %s57, 1
        %s245 = smul.addr %s244, 128
        %s246 = scalar_lea.vmem [#allocation2], %s245
        %p247 = pneg %p70
        %p248 = pneg %p67
        %p249 = pneg %p91
        %p250 = pneg %p88
        %p251 = pneg %p112
        %p252 = pneg %p109
        %p253 = pneg %p138
        %p254 = pneg %p135
        %s255 = sand.u32 %s125, 1
        %s256 = scalar_lea.sflag [#allocation4], %s255
        %s257 = sand.u32 %s125, 1
        %s258 = smul.addr %s257, 16
        %s259 = scalar_lea.vmem [#allocation5], %s258
        %p260 = pneg %p164
        %p261 = pneg %p161
        %s262 = smul.u32 2, %s23
        %p263 = scmp.lt.s32.totalorder %s262, 3
        %s264 = scalar_select %p263, %s262, 3
        %s265 = smul.addr %s264, 8
        %s266 = scalar_lea.vmem %s5, %s265
        %s267 = smul.u32 2, %s23
        %p268 = scmp.lt.s32.totalorder %s267, 3
        %s269 = scalar_select %p268, %s267, 3
        %s270 = smul.addr %s269, 8
        %s271 = scalar_lea.vmem %s0, %s270
        %s272 = smul.u32 2, %s23
        %s273 = smul.u32 16, %s23
        %s274 = smul.u32 2, %s23
        %s275 = smul.u32 2, %s23
        %p276 = scmp.lt.s32.totalorder %s275, 3
        %s277 = scalar_select %p276, %s275, 3
        %s278 = smul.addr %s277, 8
        %s279 = scalar_lea.vmem %s5, %s278
        %s280 = smul.u32 2, %s23
        %v281 = vld [vmem:[%s271] sm:$0xff]
        %v282 = vld [vmem:[%s271 + $0x8] sm:$0xff]
        %v283 = vld [vmem:[%s230] sm:$0xff]
        %v284 = vld [vmem:[%s230 + $0x8] sm:$0xff]
        %v285 = vld [vmem:[%s230 + $0x10] sm:$0xff]
        %v286 = vld [vmem:[%s230 + $0x18] sm:$0xff]
        %v287 = vld [vmem:[%s230 + $0x20] sm:$0xff]
        %v288 = vld [vmem:[%s230 + $0x28] sm:$0xff]
        %v289 = vld [vmem:[%s230 + $0x30] sm:$0xff]
        %v290 = vld [vmem:[%s230 + $0x38] sm:$0xff]
        %v291 = vld [vmem:[%s230 + $0x40] sm:$0xff]
        %v292 = vld [vmem:[%s230 + $0x48] sm:$0xff]
        %v293 = vld [vmem:[%s230 + $0x50] sm:$0xff]
        %v294 = vld [vmem:[%s230 + $0x58] sm:$0xff]
        %v295 = vld [vmem:[%s230 + $0x60] sm:$0xff]
        %v296 = vld [vmem:[%s230 + $0x68] sm:$0xff]
        %v297 = vld [vmem:[%s230 + $0x70] sm:$0xff]
        %v298 = vld [vmem:[%s230 + $0x78] sm:$0xff]
        %v299 = vld [vmem:[%s2] sm:$0xff]
        %v300 = vld [vmem:[%s2 + $0x8] sm:$0xff]
        %v301 = vld [vmem:[%s2 + $0x10] sm:$0xff]
        %v302 = vld [vmem:[%s2 + $0x18] sm:$0xff]
        %vm303 = vcmask 261120
        %v305 = vsel %vm303, %v281, 0
        %v308 = vsel %vm303, %v282, 0
        %310 = vmatprep.subr.mxu0 0.0
        %311 = vmatpush1.msra.mxu0 %v299
        %312 = vmatprep.subr.mxu0 0.0
        %313 = vmatpush1.msra.mxu0 %v300
        %314 = vmatprep.subr.mxu0 0.0
        %315 = vmatpush1.msra.mxu0 %v301
        %316 = vmatprep.subr.mxu0 0.0
        %317 = vmatpush1.msra.mxu0 %v302
        %318 = vmatprep.subr.mxu0 0.0
        %319 = vmatpush1.msra.mxu0 0.0
        %320 = vmatprep.subr.mxu0 0.0
        %321 = vmatpush1.msra.mxu0 0.0
        %322 = vmatprep.subr.mxu0 0.0
        %323 = vmatpush1.msra.mxu0 0.0
        %324 = vmatprep.subr.mxu0 0.0
        %325 = vmatpush1.msra.mxu0 0.0
        %326 = vmatprep.subr.mxu0 0.0
        %327 = vmatpush1.msra.mxu0 0.0
        %328 = vmatprep.subr.mxu0 0.0
        %329 = vmatpush1.msra.mxu0 0.0
        %330 = vmatprep.subr.mxu0 0.0
        %331 = vmatpush1.msra.mxu0 0.0
        %332 = vmatprep.subr.mxu0 0.0
        %333 = vmatpush1.msra.mxu0 0.0
        %334 = vmatprep.subr.mxu0 0.0
        %335 = vmatpush1.msra.mxu0 0.0
        %336 = vmatprep.subr.mxu0 0.0
        %337 = vmatpush1.msra.mxu0 0.0
        %338 = vmatprep.subr.mxu0 0.0
        %339 = vmatpush1.msra.mxu0 0.0
        %340 = vmatprep.subr.mxu0 0.0
        %341 = vmatpush1.msra.mxu0 0.0
        %342 = vmatprep.subr.mxu0 0.0
        %343 = vmatpush1.msra.mxu0 0.0
        %344 = vmatprep.subr.mxu0 0.0
        %345 = vmatpush1.msra.mxu0 0.0
        %346 = vmatprep.subr.mxu0 0.0
        %347 = vmatpush1.msra.mxu0 0.0
        %348 = vmatprep.subr.mxu0 0.0
        %349 = vmatpush1.msra.mxu0 0.0
        %350 = vmatprep.subr.mxu0 0.0
        %351 = vmatpush1.msra.mxu0 0.0
        %352 = vmatprep.subr.mxu0 0.0
        %353 = vmatpush1.msra.mxu0 0.0
        %354 = vmatprep.subr.mxu0 0.0
        %355 = vmatpush1.msra.mxu0 0.0
        %356 = vmatprep.subr.mxu0 0.0
        %357 = vmatpush1.msra.mxu0 0.0
        %358 = vmatprep.subr.mxu0 0.0
        %359 = vmatpush1.msra.mxu0 0.0
        %360 = vmatprep.subr.mxu0 0.0
        %361 = vmatpush1.msra.mxu0 0.0
        %362 = vmatprep.subr.mxu0 0.0
        %363 = vmatpush1.msra.mxu0 0.0
        %364 = vmatprep.subr.mxu0 0.0
        %365 = vmatpush1.msra.mxu0 0.0
        %366 = vmatprep.subr.mxu0 0.0
        %367 = vmatpush1.msra.mxu0 0.0
        %368 = vmatprep.subr.mxu0 0.0
        %369 = vmatpush1.msra.mxu0 0.0
        %370 = vmatprep.subr.mxu0 0.0
        %371 = vmatpush1.msra.mxu0 0.0
        %372 = vmatprep.subr.mxu0 0.0
        %373 = vmatpush1.msra.mxu0 0.0
        %374 = vmatprep.mubr.f32.mxu0 0.0
        %375 = vmatmul.mubr.f32.gmra.mrb[0].mxu0 %v305
        %v376 = vpop.f32.mrb[0].mxu0
        %v377 = vadd.f32 0.0, %v376
        %v378 = vpop.f32.mrb[0].mxu0
        %379 = vmatprep.mubr.f32.mxu0 0.0
        %380 = vmatmul.mubr.f32.gmra.mrb[0].mxu0 %v308
        %v381 = vpop.f32.mrb[0].mxu0
        %v382 = vadd.f32 0.0, %v381
        %v383 = vpop.f32.mrb[0].mxu0
        %384 = vdwg.mxu0
        %v387 = vcombine.high %v377, %v377
        %v389 = vunpack.c.l.s4 1966171168
        %v390 = vunpack.c.0.s8 %v389
        %v391 = vlaneseq
        %v392 = vshrl.u32 %v391, 7
        %v393 = vsub.s32 %v390, %v392
        %v394 = vrot.slane %v377, %v393
        %v396 = vunpack.c.l.s4 1966171168
        %v397 = vunpack.c.0.s8 %v396
        %v398 = vlaneseq
        %v399 = vshrl.u32 %v398, 7
        %v400 = vsub.s32 %v397, %v399
        %v401 = vrot.slane %v387, %v400
        %v402 = vcombine.high %v394, %v394
        %v403 = vcombine.high %v401, %v401
        %v405 = vunpack.c.l.s4 1966171168
        %v406 = vunpack.c.0.s8 %v405
        %v407 = vlaneseq
        %v408 = vshrl.u32 %v407, 7
        %v409 = vsub.s32 %v406, %v408
        %v410 = vrot.slane %v394, %v409
        %v412 = vunpack.c.l.s4 1966171168
        %v413 = vunpack.c.0.s8 %v412
        %v414 = vlaneseq
        %v415 = vshrl.u32 %v414, 7
        %v416 = vsub.s32 %v413, %v415
        %v417 = vrot.slane %v401, %v416
        %v419 = vunpack.c.l.s4 1966171168
        %v420 = vunpack.c.0.s8 %v419
        %v421 = vlaneseq
        %v422 = vshrl.u32 %v421, 7
        %v423 = vsub.s32 %v420, %v422
        %v424 = vrot.slane %v402, %v423
        %v426 = vunpack.c.l.s4 1966171168
        %v427 = vunpack.c.0.s8 %v426
        %v428 = vlaneseq
        %v429 = vshrl.u32 %v428, 7
        %v430 = vsub.s32 %v427, %v429
        %v431 = vrot.slane %v403, %v430
        %v432 = vcombine.high %v410, %v410
        %v433 = vcombine.high %v417, %v417
        %v434 = vcombine.high %v424, %v424
        %v435 = vcombine.high %v431, %v431
        %v436 = vcombine.high %v382, %v382
        %v438 = vunpack.c.l.s4 1966171168
        %v439 = vunpack.c.0.s8 %v438
        %v440 = vlaneseq
        %v441 = vshrl.u32 %v440, 7
        %v442 = vsub.s32 %v439, %v441
        %v443 = vrot.slane %v382, %v442
        %v445 = vunpack.c.l.s4 1966171168
        %v446 = vunpack.c.0.s8 %v445
        %v447 = vlaneseq
        %v448 = vshrl.u32 %v447, 7
        %v449 = vsub.s32 %v446, %v448
        %v450 = vrot.slane %v436, %v449
        %v451 = vcombine.high %v443, %v443
        %v452 = vcombine.high %v450, %v450
        %v454 = vunpack.c.l.s4 1966171168
        %v455 = vunpack.c.0.s8 %v454
        %v456 = vlaneseq
        %v457 = vshrl.u32 %v456, 7
        %v458 = vsub.s32 %v455, %v457
        %v459 = vrot.slane %v443, %v458
        %v461 = vunpack.c.l.s4 1966171168
        %v462 = vunpack.c.0.s8 %v461
        %v463 = vlaneseq
        %v464 = vshrl.u32 %v463, 7
        %v465 = vsub.s32 %v462, %v464
        %v466 = vrot.slane %v450, %v465
        %v468 = vunpack.c.l.s4 1966171168
        %v469 = vunpack.c.0.s8 %v468
        %v470 = vlaneseq
        %v471 = vshrl.u32 %v470, 7
        %v472 = vsub.s32 %v469, %v471
        %v473 = vrot.slane %v451, %v472
        %v475 = vunpack.c.l.s4 1966171168
        %v476 = vunpack.c.0.s8 %v475
        %v477 = vlaneseq
        %v478 = vshrl.u32 %v477, 7
        %v479 = vsub.s32 %v476, %v478
        %v480 = vrot.slane %v452, %v479
        %v481 = vcombine.high %v459, %v459
        %v482 = vcombine.high %v466, %v466
        %v483 = vcombine.high %v473, %v473
        %v484 = vcombine.high %v480, %v480
        %v485 = vlaneseq
        %v486 = vshrl.u32 %v485, 7
        %v487 = vsub.s32 0, %v486
        %v488 = vrot.slane %v410, %v487
        %v489 = vlaneseq
        %v490 = vshrl.u32 %v489, 7
        %v491 = vsub.s32 0, %v490
        %v492 = vrot.slane %v424, %v491
        %v493 = vlaneseq
        %v494 = vshrl.u32 %v493, 7
        %v495 = vsub.s32 0, %v494
        %v496 = vrot.slane %v432, %v495
        %v497 = vlaneseq
        %v498 = vshrl.u32 %v497, 7
        %v499 = vsub.s32 0, %v498
        %v500 = vrot.slane %v434, %v499
        %v501 = vlaneseq
        %v502 = vshrl.u32 %v501, 7
        %v503 = vsub.s32 0, %v502
        %v504 = vrot.slane %v417, %v503
        %v505 = vlaneseq
        %v506 = vshrl.u32 %v505, 7
        %v507 = vsub.s32 0, %v506
        %v508 = vrot.slane %v431, %v507
        %v509 = vlaneseq
        %v510 = vshrl.u32 %v509, 7
        %v511 = vsub.s32 0, %v510
        %v512 = vrot.slane %v433, %v511
        %v513 = vlaneseq
        %v514 = vshrl.u32 %v513, 7
        %v515 = vsub.s32 0, %v514
        %v516 = vrot.slane %v435, %v515
        %v517 = vlaneseq
        %v518 = vshrl.u32 %v517, 7
        %v519 = vsub.s32 0, %v518
        %v520 = vrot.slane %v459, %v519
        %v521 = vlaneseq
        %v522 = vshrl.u32 %v521, 7
        %v523 = vsub.s32 0, %v522
        %v524 = vrot.slane %v473, %v523
        %v525 = vlaneseq
        %v526 = vshrl.u32 %v525, 7
        %v527 = vsub.s32 0, %v526
        %v528 = vrot.slane %v481, %v527
        %v529 = vlaneseq
        %v530 = vshrl.u32 %v529, 7
        %v531 = vsub.s32 0, %v530
        %v532 = vrot.slane %v483, %v531
        %v533 = vlaneseq
        %v534 = vshrl.u32 %v533, 7
        %v535 = vsub.s32 0, %v534
        %v536 = vrot.slane %v466, %v535
        %v537 = vlaneseq
        %v538 = vshrl.u32 %v537, 7
        %v539 = vsub.s32 0, %v538
        %v540 = vrot.slane %v480, %v539
        %v541 = vlaneseq
        %v542 = vshrl.u32 %v541, 7
        %v543 = vsub.s32 0, %v542
        %v544 = vrot.slane %v482, %v543
        %v545 = vlaneseq
        %v546 = vshrl.u32 %v545, 7
        %v547 = vsub.s32 0, %v546
        %v548 = vrot.slane %v484, %v547
        %v565 = vmul.f32 %v283, %v488
        %v566 = vmul.f32 %v284, %v492
        %v567 = vmul.f32 %v285, %v496
        %v568 = vmul.f32 %v286, %v500
        %v569 = vmul.f32 %v287, %v504
        %v570 = vmul.f32 %v288, %v508
        %v571 = vmul.f32 %v289, %v512
        %v572 = vmul.f32 %v290, %v516
        %v573 = vmul.f32 %v291, %v520
        %v574 = vmul.f32 %v292, %v524
        %v575 = vmul.f32 %v293, %v528
        %v576 = vmul.f32 %v294, %v532
        %v577 = vmul.f32 %v295, %v536
        %v578 = vmul.f32 %v296, %v540
        %v579 = vmul.f32 %v297, %v544
        %v580 = vmul.f32 %v298, %v548
        %v581 = vsel %vm303, %v565, 0.0
        %582 = vadd.xlane.f32.xlu0 %v581
        %v583 = vpop.xlane.xlu0 %582
        %v584 = vsel %vm303, %v566, 0.0
        %585 = vadd.xlane.f32.xlu0 %v584
        %v586 = vpop.xlane.xlu0 %585
        %v587 = vsel %vm303, %v567, 0.0
        %588 = vadd.xlane.f32.xlu0 %v587
        %v589 = vpop.xlane.xlu0 %588
        %v590 = vsel %vm303, %v568, 0.0
        %591 = vadd.xlane.f32.xlu0 %v590
        %v592 = vpop.xlane.xlu0 %591
        %v593 = vsel %vm303, %v569, 0.0
        %594 = vadd.xlane.f32.xlu0 %v593
        %v595 = vpop.xlane.xlu0 %594
        %v596 = vsel %vm303, %v570, 0.0
        %597 = vadd.xlane.f32.xlu0 %v596
        %v598 = vpop.xlane.xlu0 %597
        %v599 = vsel %vm303, %v571, 0.0
        %600 = vadd.xlane.f32.xlu0 %v599
        %v601 = vpop.xlane.xlu0 %600
        %v602 = vsel %vm303, %v572, 0.0
        %603 = vadd.xlane.f32.xlu0 %v602
        %v604 = vpop.xlane.xlu0 %603
        %v605 = vsel %vm303, %v573, 0.0
        %606 = vadd.xlane.f32.xlu0 %v605
        %v607 = vpop.xlane.xlu0 %606
        %v608 = vsel %vm303, %v574, 0.0
        %609 = vadd.xlane.f32.xlu0 %v608
        %v610 = vpop.xlane.xlu0 %609
        %v611 = vsel %vm303, %v575, 0.0
        %612 = vadd.xlane.f32.xlu0 %v611
        %v613 = vpop.xlane.xlu0 %612
        %v614 = vsel %vm303, %v576, 0.0
        %615 = vadd.xlane.f32.xlu0 %v614
        %v616 = vpop.xlane.xlu0 %615
        %v617 = vsel %vm303, %v577, 0.0
        %618 = vadd.xlane.f32.xlu0 %v617
        %v619 = vpop.xlane.xlu0 %618
        %v620 = vsel %vm303, %v578, 0.0
        %621 = vadd.xlane.f32.xlu0 %v620
        %v622 = vpop.xlane.xlu0 %621
        %v623 = vsel %vm303, %v579, 0.0
        %624 = vadd.xlane.f32.xlu0 %v623
        %v625 = vpop.xlane.xlu0 %624
        %v626 = vsel %vm303, %v580, 0.0
        %627 = vadd.xlane.f32.xlu0 %v626
        %v628 = vpop.xlane.xlu0 %627
        %v645 = vlaneseq
        %v646 = vand.u32 %v645, 127
        %v647 = vlaneseq
        %v648 = vshrl.u32 %v647, 7
        %v649 = vsub.s32 %v646, %v648
        %v650 = vrot.slane %v583, %v649
        %v651 = vlaneseq
        %v652 = vshrl.u32 %v651, 7
        %v653 = vsub.s32 %v646, %v652
        %v654 = vrot.slane %v586, %v653
        %v655 = vlaneseq
        %v656 = vshrl.u32 %v655, 7
        %v657 = vsub.s32 %v646, %v656
        %v658 = vrot.slane %v589, %v657
        %v659 = vlaneseq
        %v660 = vshrl.u32 %v659, 7
        %v661 = vsub.s32 %v646, %v660
        %v662 = vrot.slane %v592, %v661
        %v663 = vlaneseq
        %v664 = vshrl.u32 %v663, 7
        %v665 = vsub.s32 %v646, %v664
        %v666 = vrot.slane %v595, %v665
        %v667 = vlaneseq
        %v668 = vshrl.u32 %v667, 7
        %v669 = vsub.s32 %v646, %v668
        %v670 = vrot.slane %v598, %v669
        %v671 = vlaneseq
        %v672 = vshrl.u32 %v671, 7
        %v673 = vsub.s32 %v646, %v672
        %v674 = vrot.slane %v601, %v673
        %v675 = vlaneseq
        %v676 = vshrl.u32 %v675, 7
        %v677 = vsub.s32 %v646, %v676
        %v678 = vrot.slane %v604, %v677
        %v679 = vlaneseq
        %v680 = vshrl.u32 %v679, 7
        %v681 = vsub.s32 %v646, %v680
        %v682 = vrot.slane %v607, %v681
        %v683 = vlaneseq
        %v684 = vshrl.u32 %v683, 7
        %v685 = vsub.s32 %v646, %v684
        %v686 = vrot.slane %v610, %v685
        %v687 = vlaneseq
        %v688 = vshrl.u32 %v687, 7
        %v689 = vsub.s32 %v646, %v688
        %v690 = vrot.slane %v613, %v689
        %v691 = vlaneseq
        %v692 = vshrl.u32 %v691, 7
        %v693 = vsub.s32 %v646, %v692
        %v694 = vrot.slane %v616, %v693
        %v695 = vlaneseq
        %v696 = vshrl.u32 %v695, 7
        %v697 = vsub.s32 %v646, %v696
        %v698 = vrot.slane %v619, %v697
        %v699 = vlaneseq
        %v700 = vshrl.u32 %v699, 7
        %v701 = vsub.s32 %v646, %v700
        %v702 = vrot.slane %v622, %v701
        %v703 = vlaneseq
        %v704 = vshrl.u32 %v703, 7
        %v705 = vsub.s32 %v646, %v704
        %v706 = vrot.slane %v625, %v705
        %v707 = vlaneseq
        %v708 = vshrl.u32 %v707, 7
        %v709 = vsub.s32 %v646, %v708
        %v710 = vrot.slane %v628, %v709
        %vm711 = vcmask 1041409
        %v712 = vsel %vm711, %v654, %v650
        %vm713 = vcmask 1042434
        %v714 = vsel %vm713, %v658, %v712
        %vm715 = vcmask 1043459
        %v716 = vsel %vm715, %v662, %v714
        %vm717 = vcmask 1044484
        %v718 = vsel %vm717, %v666, %v716
        %vm719 = vcmask 1045509
        %v720 = vsel %vm719, %v670, %v718
        %vm721 = vcmask 1046534
        %v722 = vsel %vm721, %v674, %v720
        %vm723 = vcmask 1047559
        %v724 = vsel %vm723, %v678, %v722
        %v725 = vsel %vm711, %v686, %v682
        %v726 = vsel %vm713, %v690, %v725
        %v727 = vsel %vm715, %v694, %v726
        %v728 = vsel %vm717, %v698, %v727
        %v729 = vsel %vm719, %v702, %v728
        %v730 = vsel %vm721, %v706, %v729
        %v731 = vsel %vm723, %v710, %v730
        %vm734 = vcmask 64512
        %v735 = vsel %vm734, %v724, -inf
        %736 = vmax.xlane.f32.xlu0 %v735
        %v737 = vpop.xlane.xlu0 %736
        %v738 = vsel %vm734, %v731, -inf
        %739 = vmax.xlane.f32.xlu0 %v738
        %v740 = vpop.xlane.xlu0 %739
        %v743 = vlaneseq
        %v744 = vshrl.u32 %v743, 7
        %v745 = vsub.s32 0, %v744
        %v746 = vrot.slane %v737, %v745
        %v747 = vlaneseq
        %v748 = vshrl.u32 %v747, 7
        %v749 = vsub.s32 1, %v748
        %v750 = vrot.slane %v737, %v749
        %v751 = vlaneseq
        %v752 = vshrl.u32 %v751, 7
        %v753 = vsub.s32 2, %v752
        %v754 = vrot.slane %v737, %v753
        %v755 = vlaneseq
        %v756 = vshrl.u32 %v755, 7
        %v757 = vsub.s32 3, %v756
        %v758 = vrot.slane %v737, %v757
        %v759 = vlaneseq
        %v760 = vshrl.u32 %v759, 7
        %v761 = vsub.s32 4, %v760
        %v762 = vrot.slane %v737, %v761
        %v763 = vlaneseq
        %v764 = vshrl.u32 %v763, 7
        %v765 = vsub.s32 5, %v764
        %v766 = vrot.slane %v737, %v765
        %v767 = vlaneseq
        %v768 = vshrl.u32 %v767, 7
        %v769 = vsub.s32 6, %v768
        %v770 = vrot.slane %v737, %v769
        %v771 = vlaneseq
        %v772 = vshrl.u32 %v771, 7
        %v773 = vsub.s32 7, %v772
        %v774 = vrot.slane %v737, %v773
        %v775 = vlaneseq
        %v776 = vshrl.u32 %v775, 7
        %v777 = vsub.s32 0, %v776
        %v778 = vrot.slane %v740, %v777
        %v779 = vlaneseq
        %v780 = vshrl.u32 %v779, 7
        %v781 = vsub.s32 1, %v780
        %v782 = vrot.slane %v740, %v781
        %v783 = vlaneseq
        %v784 = vshrl.u32 %v783, 7
        %v785 = vsub.s32 2, %v784
        %v786 = vrot.slane %v740, %v785
        %v787 = vlaneseq
        %v788 = vshrl.u32 %v787, 7
        %v789 = vsub.s32 3, %v788
        %v790 = vrot.slane %v740, %v789
        %v791 = vlaneseq
        %v792 = vshrl.u32 %v791, 7
        %v793 = vsub.s32 4, %v792
        %v794 = vrot.slane %v740, %v793
        %v795 = vlaneseq
        %v796 = vshrl.u32 %v795, 7
        %v797 = vsub.s32 5, %v796
        %v798 = vrot.slane %v740, %v797
        %v799 = vlaneseq
        %v800 = vshrl.u32 %v799, 7
        %v801 = vsub.s32 6, %v800
        %v802 = vrot.slane %v740, %v801
        %v803 = vlaneseq
        %v804 = vshrl.u32 %v803, 7
        %v805 = vsub.s32 7, %v804
        %v806 = vrot.slane %v740, %v805
        %v823 = vsub.f32 %v583, %v746
        %v824 = vsub.f32 %v586, %v750
        %v825 = vsub.f32 %v589, %v754
        %v826 = vsub.f32 %v592, %v758
        %v827 = vsub.f32 %v595, %v762
        %v828 = vsub.f32 %v598, %v766
        %v829 = vsub.f32 %v601, %v770
        %v830 = vsub.f32 %v604, %v774
        %v831 = vsub.f32 %v607, %v778
        %v832 = vsub.f32 %v610, %v782
        %v833 = vsub.f32 %v613, %v786
        %v834 = vsub.f32 %v616, %v790
        %v835 = vsub.f32 %v619, %v794
        %v836 = vsub.f32 %v622, %v798
        %v837 = vsub.f32 %v625, %v802
        %v838 = vsub.f32 %v628, %v806
        %v839 = vmul.f32 %v823, 1.442695
        %v840 = vpow.pop %v839
        %v841 = vmul.f32 %v824, 1.442695
        %v842 = vpow.pop %v841
        %v843 = vmul.f32 %v825, 1.442695
        %v844 = vpow.pop %v843
        %v845 = vmul.f32 %v826, 1.442695
        %v846 = vpow.pop %v845
        %v847 = vmul.f32 %v827, 1.442695
        %v848 = vpow.pop %v847
        %v849 = vmul.f32 %v828, 1.442695
        %v850 = vpow.pop %v849
        %v851 = vmul.f32 %v829, 1.442695
        %v852 = vpow.pop %v851
        %v853 = vmul.f32 %v830, 1.442695
        %v854 = vpow.pop %v853
        %v855 = vmul.f32 %v831, 1.442695
        %v856 = vpow.pop %v855
        %v857 = vmul.f32 %v832, 1.442695
        %v858 = vpow.pop %v857
        %v859 = vmul.f32 %v833, 1.442695
        %v860 = vpow.pop %v859
        %v861 = vmul.f32 %v834, 1.442695
        %v862 = vpow.pop %v861
        %v863 = vmul.f32 %v835, 1.442695
        %v864 = vpow.pop %v863
        %v865 = vmul.f32 %v836, 1.442695
        %v866 = vpow.pop %v865
        %v867 = vmul.f32 %v837, 1.442695
        %v868 = vpow.pop %v867
        %v869 = vmul.f32 %v838, 1.442695
        %v870 = vpow.pop %v869
        %887 = vset.pattern.permute.xlu0 0
        %888 = vperm.xlu0 %887, %v840
        %v889 = vpop.permute.xlu0 %888
        %890 = vset.pattern.permute.xlu0 0
        %891 = vperm.xlu0 %890, %v842
        %v892 = vpop.permute.xlu0 %891
        %893 = vset.pattern.permute.xlu0 0
        %894 = vperm.xlu0 %893, %v844
        %v895 = vpop.permute.xlu0 %894
        %896 = vset.pattern.permute.xlu0 0
        %897 = vperm.xlu0 %896, %v846
        %v898 = vpop.permute.xlu0 %897
        %899 = vset.pattern.permute.xlu0 0
        %900 = vperm.xlu0 %899, %v848
        %v901 = vpop.permute.xlu0 %900
        %902 = vset.pattern.permute.xlu0 0
        %903 = vperm.xlu0 %902, %v850
        %v904 = vpop.permute.xlu0 %903
        %905 = vset.pattern.permute.xlu0 0
        %906 = vperm.xlu0 %905, %v852
        %v907 = vpop.permute.xlu0 %906
        %908 = vset.pattern.permute.xlu0 0
        %909 = vperm.xlu0 %908, %v854
        %v910 = vpop.permute.xlu0 %909
        %911 = vset.pattern.permute.xlu0 0
        %912 = vperm.xlu0 %911, %v856
        %v913 = vpop.permute.xlu0 %912
        %914 = vset.pattern.permute.xlu0 0
        %915 = vperm.xlu0 %914, %v858
        %v916 = vpop.permute.xlu0 %915
        %917 = vset.pattern.permute.xlu0 0
        %918 = vperm.xlu0 %917, %v860
        %v919 = vpop.permute.xlu0 %918
        %920 = vset.pattern.permute.xlu0 0
        %921 = vperm.xlu0 %920, %v862
        %v922 = vpop.permute.xlu0 %921
        %923 = vset.pattern.permute.xlu0 0
        %924 = vperm.xlu0 %923, %v864
        %v925 = vpop.permute.xlu0 %924
        %926 = vset.pattern.permute.xlu0 0
        %927 = vperm.xlu0 %926, %v866
        %v928 = vpop.permute.xlu0 %927
        %929 = vset.pattern.permute.xlu0 0
        %930 = vperm.xlu0 %929, %v868
        %v931 = vpop.permute.xlu0 %930
        %932 = vset.pattern.permute.xlu0 0
        %933 = vperm.xlu0 %932, %v870
        %v934 = vpop.permute.xlu0 %933
        %v935 = vlaneseq
        %v936 = vshrl.u32 %v935, 7
        %v937 = vsub.s32 %v646, %v936
        %v938 = vrot.slane %v889, %v937
        %v939 = vlaneseq
        %v940 = vshrl.u32 %v939, 7
        %v941 = vsub.s32 %v646, %v940
        %v942 = vrot.slane %v892, %v941
        %v943 = vlaneseq
        %v944 = vshrl.u32 %v943, 7
        %v945 = vsub.s32 %v646, %v944
        %v946 = vrot.slane %v895, %v945
        %v947 = vlaneseq
        %v948 = vshrl.u32 %v947, 7
        %v949 = vsub.s32 %v646, %v948
        %v950 = vrot.slane %v898, %v949
        %v951 = vlaneseq
        %v952 = vshrl.u32 %v951, 7
        %v953 = vsub.s32 %v646, %v952
        %v954 = vrot.slane %v901, %v953
        %v955 = vlaneseq
        %v956 = vshrl.u32 %v955, 7
        %v957 = vsub.s32 %v646, %v956
        %v958 = vrot.slane %v904, %v957
        %v959 = vlaneseq
        %v960 = vshrl.u32 %v959, 7
        %v961 = vsub.s32 %v646, %v960
        %v962 = vrot.slane %v907, %v961
        %v963 = vlaneseq
        %v964 = vshrl.u32 %v963, 7
        %v965 = vsub.s32 %v646, %v964
        %v966 = vrot.slane %v910, %v965
        %v967 = vlaneseq
        %v968 = vshrl.u32 %v967, 7
        %v969 = vsub.s32 %v646, %v968
        %v970 = vrot.slane %v913, %v969
        %v971 = vlaneseq
        %v972 = vshrl.u32 %v971, 7
        %v973 = vsub.s32 %v646, %v972
        %v974 = vrot.slane %v916, %v973
        %v975 = vlaneseq
        %v976 = vshrl.u32 %v975, 7
        %v977 = vsub.s32 %v646, %v976
        %v978 = vrot.slane %v919, %v977
        %v979 = vlaneseq
        %v980 = vshrl.u32 %v979, 7
        %v981 = vsub.s32 %v646, %v980
        %v982 = vrot.slane %v922, %v981
        %v983 = vlaneseq
        %v984 = vshrl.u32 %v983, 7
        %v985 = vsub.s32 %v646, %v984
        %v986 = vrot.slane %v925, %v985
        %v987 = vlaneseq
        %v988 = vshrl.u32 %v987, 7
        %v989 = vsub.s32 %v646, %v988
        %v990 = vrot.slane %v928, %v989
        %v991 = vlaneseq
        %v992 = vshrl.u32 %v991, 7
        %v993 = vsub.s32 %v646, %v992
        %v994 = vrot.slane %v931, %v993
        %v995 = vlaneseq
        %v996 = vshrl.u32 %v995, 7
        %v997 = vsub.s32 %v646, %v996
        %v998 = vrot.slane %v934, %v997
        %v999 = vsel %vm711, %v942, %v938
        %v1000 = vsel %vm713, %v946, %v999
        %v1001 = vsel %vm715, %v950, %v1000
        %v1002 = vsel %vm717, %v954, %v1001
        %v1003 = vsel %vm719, %v958, %v1002
        %v1004 = vsel %vm721, %v962, %v1003
        %v1005 = vsel %vm723, %v966, %v1004
        %v1006 = vsel %vm711, %v974, %v970
        %v1007 = vsel %vm713, %v978, %v1006
        %v1008 = vsel %vm715, %v982, %v1007
        %v1009 = vsel %vm717, %v986, %v1008
        %v1010 = vsel %vm719, %v990, %v1009
        %v1011 = vsel %vm721, %v994, %v1010
        %v1012 = vsel %vm723, %v998, %v1011
        %v1015 = vsel %vm734, %v1005, 0.0
        %1016 = vadd.xlane.f32.xlu0 %v1015
        %v1017 = vpop.xlane.xlu0 %1016
        %v1018 = vsel %vm734, %v1012, 0.0
        %1019 = vadd.xlane.f32.xlu0 %v1018
        %v1020 = vpop.xlane.xlu0 %1019
        %v1023 = vlaneseq
        %v1024 = vshrl.u32 %v1023, 7
        %v1025 = vsub.s32 0, %v1024
        %v1026 = vrot.slane %v1017, %v1025
        %v1027 = vlaneseq
        %v1028 = vshrl.u32 %v1027, 7
        %v1029 = vsub.s32 1, %v1028
        %v1030 = vrot.slane %v1017, %v1029
        %v1031 = vlaneseq
        %v1032 = vshrl.u32 %v1031, 7
        %v1033 = vsub.s32 2, %v1032
        %v1034 = vrot.slane %v1017, %v1033
        %v1035 = vlaneseq
        %v1036 = vshrl.u32 %v1035, 7
        %v1037 = vsub.s32 3, %v1036
        %v1038 = vrot.slane %v1017, %v1037
        %v1039 = vlaneseq
        %v1040 = vshrl.u32 %v1039, 7
        %v1041 = vsub.s32 4, %v1040
        %v1042 = vrot.slane %v1017, %v1041
        %v1043 = vlaneseq
        %v1044 = vshrl.u32 %v1043, 7
        %v1045 = vsub.s32 5, %v1044
        %v1046 = vrot.slane %v1017, %v1045
        %v1047 = vlaneseq
        %v1048 = vshrl.u32 %v1047, 7
        %v1049 = vsub.s32 6, %v1048
        %v1050 = vrot.slane %v1017, %v1049
        %v1051 = vlaneseq
        %v1052 = vshrl.u32 %v1051, 7
        %v1053 = vsub.s32 7, %v1052
        %v1054 = vrot.slane %v1017, %v1053
        %v1055 = vlaneseq
        %v1056 = vshrl.u32 %v1055, 7
        %v1057 = vsub.s32 0, %v1056
        %v1058 = vrot.slane %v1020, %v1057
        %v1059 = vlaneseq
        %v1060 = vshrl.u32 %v1059, 7
        %v1061 = vsub.s32 1, %v1060
        %v1062 = vrot.slane %v1020, %v1061
        %v1063 = vlaneseq
        %v1064 = vshrl.u32 %v1063, 7
        %v1065 = vsub.s32 2, %v1064
        %v1066 = vrot.slane %v1020, %v1065
        %v1067 = vlaneseq
        %v1068 = vshrl.u32 %v1067, 7
        %v1069 = vsub.s32 3, %v1068
        %v1070 = vrot.slane %v1020, %v1069
        %v1071 = vlaneseq
        %v1072 = vshrl.u32 %v1071, 7
        %v1073 = vsub.s32 4, %v1072
        %v1074 = vrot.slane %v1020, %v1073
        %v1075 = vlaneseq
        %v1076 = vshrl.u32 %v1075, 7
        %v1077 = vsub.s32 5, %v1076
        %v1078 = vrot.slane %v1020, %v1077
        %v1079 = vlaneseq
        %v1080 = vshrl.u32 %v1079, 7
        %v1081 = vsub.s32 6, %v1080
        %v1082 = vrot.slane %v1020, %v1081
        %v1083 = vlaneseq
        %v1084 = vshrl.u32 %v1083, 7
        %v1085 = vsub.s32 7, %v1084
        %v1086 = vrot.slane %v1020, %v1085
        %v1103 = vrcp.pop %v1026
        %v1104 = vmul.f32 %v840, %v1103
        %v1105 = vrcp.pop %v1030
        %v1106 = vmul.f32 %v842, %v1105
        %v1107 = vrcp.pop %v1034
        %v1108 = vmul.f32 %v844, %v1107
        %v1109 = vrcp.pop %v1038
        %v1110 = vmul.f32 %v846, %v1109
        %v1111 = vrcp.pop %v1042
        %v1112 = vmul.f32 %v848, %v1111
        %v1113 = vrcp.pop %v1046
        %v1114 = vmul.f32 %v850, %v1113
        %v1115 = vrcp.pop %v1050
        %v1116 = vmul.f32 %v852, %v1115
        %v1117 = vrcp.pop %v1054
        %v1118 = vmul.f32 %v854, %v1117
        %v1119 = vrcp.pop %v1058
        %v1120 = vmul.f32 %v856, %v1119
        %v1121 = vrcp.pop %v1062
        %v1122 = vmul.f32 %v858, %v1121
        %v1123 = vrcp.pop %v1066
        %v1124 = vmul.f32 %v860, %v1123
        %v1125 = vrcp.pop %v1070
        %v1126 = vmul.f32 %v862, %v1125
        %v1127 = vrcp.pop %v1074
        %v1128 = vmul.f32 %v864, %v1127
        %v1129 = vrcp.pop %v1078
        %v1130 = vmul.f32 %v866, %v1129
        %v1131 = vrcp.pop %v1082
        %v1132 = vmul.f32 %v868, %v1131
        %v1133 = vrcp.pop %v1086
        %v1134 = vmul.f32 %v870, %v1133
        %1136 = vset.pattern.permute.xlu0 0
        %1137 = vperm.xlu0 %1136, %v1104
        %v1138 = vpop.permute.xlu0 %1137
        %1141 = vset.pattern.permute.xlu0 0
        %1142 = vperm.xlu0 %1141, %v1106
        %v1143 = vpop.permute.xlu0 %1142
        %1146 = vset.pattern.permute.xlu0 0
        %1147 = vperm.xlu0 %1146, %v1108
        %v1148 = vpop.permute.xlu0 %1147
        %1151 = vset.pattern.permute.xlu0 0
        %1152 = vperm.xlu0 %1151, %v1110
        %v1153 = vpop.permute.xlu0 %1152
        %1156 = vset.pattern.permute.xlu0 0
        %1157 = vperm.xlu0 %1156, %v1112
        %v1158 = vpop.permute.xlu0 %1157
        %1161 = vset.pattern.permute.xlu0 0
        %1162 = vperm.xlu0 %1161, %v1114
        %v1163 = vpop.permute.xlu0 %1162
        %1166 = vset.pattern.permute.xlu0 0
        %1167 = vperm.xlu0 %1166, %v1116
        %v1168 = vpop.permute.xlu0 %1167
        %1171 = vset.pattern.permute.xlu0 0
        %1172 = vperm.xlu0 %1171, %v1118
        %v1173 = vpop.permute.xlu0 %1172
        %1176 = vset.pattern.permute.xlu0 0
        %1177 = vperm.xlu0 %1176, %v1120
        %v1178 = vpop.permute.xlu0 %1177
        %1181 = vset.pattern.permute.xlu0 0
        %1182 = vperm.xlu0 %1181, %v1122
        %v1183 = vpop.permute.xlu0 %1182
        %1186 = vset.pattern.permute.xlu0 0
        %1187 = vperm.xlu0 %1186, %v1124
        %v1188 = vpop.permute.xlu0 %1187
        %1191 = vset.pattern.permute.xlu0 0
        %1192 = vperm.xlu0 %1191, %v1126
        %v1193 = vpop.permute.xlu0 %1192
        %1196 = vset.pattern.permute.xlu0 0
        %1197 = vperm.xlu0 %1196, %v1128
        %v1198 = vpop.permute.xlu0 %1197
        %1201 = vset.pattern.permute.xlu0 0
        %1202 = vperm.xlu0 %1201, %v1130
        %v1203 = vpop.permute.xlu0 %1202
        %1206 = vset.pattern.permute.xlu0 0
        %1207 = vperm.xlu0 %1206, %v1132
        %v1208 = vpop.permute.xlu0 %1207
        %1211 = vset.pattern.permute.xlu0 0
        %1212 = vperm.xlu0 %1211, %v1134
        %v1213 = vpop.permute.xlu0 %1212
        %v1215 = vmul.f32 %v1138, %v283
        %v1216 = vmul.f32 %v1143, %v284
        %v1217 = vmul.f32 %v1148, %v285
        %v1218 = vmul.f32 %v1153, %v286
        %v1219 = vmul.f32 %v1158, %v287
        %v1220 = vmul.f32 %v1163, %v288
        %v1221 = vmul.f32 %v1168, %v289
        %v1222 = vmul.f32 %v1173, %v290
        %v1223 = vmul.f32 %v1178, %v291
        %v1224 = vmul.f32 %v1183, %v292
        %v1225 = vmul.f32 %v1188, %v293
        %v1226 = vmul.f32 %v1193, %v294
        %v1227 = vmul.f32 %v1198, %v295
        %v1228 = vmul.f32 %v1203, %v296
        %v1229 = vmul.f32 %v1208, %v297
        %v1230 = vmul.f32 %v1213, %v298
        %v1231 = vsel %vm303, %v1215, 0.0
        %v1232 = vrot.slane %v1231, 4
        %v1233 = vadd.f32 %v1231, %v1232
        %v1234 = vrot.slane %v1233, 2
        %v1235 = vadd.f32 %v1233, %v1234
        %v1236 = vrot.slane %v1235, 1
        %v1237 = vadd.f32 %v1235, %v1236
        %v1238 = vsel %vm303, %v1216, 0.0
        %v1239 = vrot.slane %v1238, 4
        %v1240 = vadd.f32 %v1238, %v1239
        %v1241 = vrot.slane %v1240, 2
        %v1242 = vadd.f32 %v1240, %v1241
        %v1243 = vrot.slane %v1242, 1
        %v1244 = vadd.f32 %v1242, %v1243
        %v1245 = vsel %vm303, %v1217, 0.0
        %v1246 = vrot.slane %v1245, 4
        %v1247 = vadd.f32 %v1245, %v1246
        %v1248 = vrot.slane %v1247, 2
        %v1249 = vadd.f32 %v1247, %v1248
        %v1250 = vrot.slane %v1249, 1
        %v1251 = vadd.f32 %v1249, %v1250
        %v1252 = vsel %vm303, %v1218, 0.0
        %v1253 = vrot.slane %v1252, 4
        %v1254 = vadd.f32 %v1252, %v1253
        %v1255 = vrot.slane %v1254, 2
        %v1256 = vadd.f32 %v1254, %v1255
        %v1257 = vrot.slane %v1256, 1
        %v1258 = vadd.f32 %v1256, %v1257
        %v1259 = vsel %vm303, %v1219, 0.0
        %v1260 = vrot.slane %v1259, 4
        %v1261 = vadd.f32 %v1259, %v1260
        %v1262 = vrot.slane %v1261, 2
        %v1263 = vadd.f32 %v1261, %v1262
        %v1264 = vrot.slane %v1263, 1
        %v1265 = vadd.f32 %v1263, %v1264
        %v1266 = vsel %vm303, %v1220, 0.0
        %v1267 = vrot.slane %v1266, 4
        %v1268 = vadd.f32 %v1266, %v1267
        %v1269 = vrot.slane %v1268, 2
        %v1270 = vadd.f32 %v1268, %v1269
        %v1271 = vrot.slane %v1270, 1
        %v1272 = vadd.f32 %v1270, %v1271
        %v1273 = vsel %vm303, %v1221, 0.0
        %v1274 = vrot.slane %v1273, 4
        %v1275 = vadd.f32 %v1273, %v1274
        %v1276 = vrot.slane %v1275, 2
        %v1277 = vadd.f32 %v1275, %v1276
        %v1278 = vrot.slane %v1277, 1
        %v1279 = vadd.f32 %v1277, %v1278
        %v1280 = vsel %vm303, %v1222, 0.0
        %v1281 = vrot.slane %v1280, 4
        %v1282 = vadd.f32 %v1280, %v1281
        %v1283 = vrot.slane %v1282, 2
        %v1284 = vadd.f32 %v1282, %v1283
        %v1285 = vrot.slane %v1284, 1
        %v1286 = vadd.f32 %v1284, %v1285
        %v1287 = vsel %vm303, %v1223, 0.0
        %v1288 = vrot.slane %v1287, 4
        %v1289 = vadd.f32 %v1287, %v1288
        %v1290 = vrot.slane %v1289, 2
        %v1291 = vadd.f32 %v1289, %v1290
        %v1292 = vrot.slane %v1291, 1
        %v1293 = vadd.f32 %v1291, %v1292
        %v1294 = vsel %vm303, %v1224, 0.0
        %v1295 = vrot.slane %v1294, 4
        %v1296 = vadd.f32 %v1294, %v1295
        %v1297 = vrot.slane %v1296, 2
        %v1298 = vadd.f32 %v1296, %v1297
        %v1299 = vrot.slane %v1298, 1
        %v1300 = vadd.f32 %v1298, %v1299
        %v1301 = vsel %vm303, %v1225, 0.0
        %v1302 = vrot.slane %v1301, 4
        %v1303 = vadd.f32 %v1301, %v1302
        %v1304 = vrot.slane %v1303, 2
        %v1305 = vadd.f32 %v1303, %v1304
        %v1306 = vrot.slane %v1305, 1
        %v1307 = vadd.f32 %v1305, %v1306
        %v1308 = vsel %vm303, %v1226, 0.0
        %v1309 = vrot.slane %v1308, 4
        %v1310 = vadd.f32 %v1308, %v1309
        %v1311 = vrot.slane %v1310, 2
        %v1312 = vadd.f32 %v1310, %v1311
        %v1313 = vrot.slane %v1312, 1
        %v1314 = vadd.f32 %v1312, %v1313
        %v1315 = vsel %vm303, %v1227, 0.0
        %v1316 = vrot.slane %v1315, 4
        %v1317 = vadd.f32 %v1315, %v1316
        %v1318 = vrot.slane %v1317, 2
        %v1319 = vadd.f32 %v1317, %v1318
        %v1320 = vrot.slane %v1319, 1
        %v1321 = vadd.f32 %v1319, %v1320
        %v1322 = vsel %vm303, %v1228, 0.0
        %v1323 = vrot.slane %v1322, 4
        %v1324 = vadd.f32 %v1322, %v1323
        %v1325 = vrot.slane %v1324, 2
        %v1326 = vadd.f32 %v1324, %v1325
        %v1327 = vrot.slane %v1326, 1
        %v1328 = vadd.f32 %v1326, %v1327
        %v1329 = vsel %vm303, %v1229, 0.0
        %v1330 = vrot.slane %v1329, 4
        %v1331 = vadd.f32 %v1329, %v1330
        %v1332 = vrot.slane %v1331, 2
        %v1333 = vadd.f32 %v1331, %v1332
        %v1334 = vrot.slane %v1333, 1
        %v1335 = vadd.f32 %v1333, %v1334
        %v1336 = vsel %vm303, %v1230, 0.0
        %v1337 = vrot.slane %v1336, 4
        %v1338 = vadd.f32 %v1336, %v1337
        %v1339 = vrot.slane %v1338, 2
        %v1340 = vadd.f32 %v1338, %v1339
        %v1341 = vrot.slane %v1340, 1
        %v1342 = vadd.f32 %v1340, %v1341
        %v1359 = vsel %vm711, %v1244, %v1237
        %v1360 = vsel %vm713, %v1251, %v1359
        %v1361 = vsel %vm715, %v1258, %v1360
        %v1362 = vsel %vm717, %v1265, %v1361
        %v1363 = vsel %vm719, %v1272, %v1362
        %v1364 = vsel %vm721, %v1279, %v1363
        %v1365 = vsel %vm723, %v1286, %v1364
        %v1366 = vsel %vm711, %v1300, %v1293
        %v1367 = vsel %vm713, %v1307, %v1366
        %v1368 = vsel %vm715, %v1314, %v1367
        %v1369 = vsel %vm717, %v1321, %v1368
        %v1370 = vsel %vm719, %v1328, %v1369
        %v1371 = vsel %vm721, %v1335, %v1370
        %v1372 = vsel %vm723, %v1342, %v1371
        %1375 = vrot.lane.b32.xlu0 %v281, 32
        %v1376 = vpop.permute.xlu0 %1375
        %1377 = vrot.lane.b32.xlu0 %v282, 32
        %v1378 = vpop.permute.xlu0 %1377
        %v1381 = vsel %vm303, %v1365, %v1376
        %v1382 = vsel %vm303, %v1372, %v1378
        %v1383 = vld [vmem:[%s3] sm:$0xff]
        %v1384 = vld [vmem:[%s3 + $0x8] sm:$0xff]
        %v1385 = vld [vmem:[%s3 + $0x10] sm:$0xff]
        %v1386 = vld [vmem:[%s3 + $0x18] sm:$0xff]
        %v1387 = vld [vmem:[%s3 + $0x20] sm:$0xff]
        %v1388 = vld [vmem:[%s3 + $0x28] sm:$0xff]
        %v1389 = vld [vmem:[%s3 + $0x30] sm:$0xff]
        %v1390 = vld [vmem:[%s3 + $0x38] sm:$0xff]
        %vm1391 = vcmask 523264
        %v1393 = vsel %vm1391, %v1381, 0
        %v1396 = vsel %vm1391, %v1382, 0
        %1398 = vmatprep.subr.mxu0 0.0
        %1399 = vmatpush1.msra.mxu0 %v1383
        %1400 = vmatprep.subr.mxu0 0.0
        %1401 = vmatpush1.msra.mxu0 %v1384
        %1402 = vmatprep.subr.mxu0 0.0
        %1403 = vmatpush1.msra.mxu0 %v1385
        %1404 = vmatprep.subr.mxu0 0.0
        %1405 = vmatpush1.msra.mxu0 %v1386
        %1406 = vmatprep.subr.mxu0 0.0
        %1407 = vmatpush1.msra.mxu0 %v1387
        %1408 = vmatprep.subr.mxu0 0.0
        %1409 = vmatpush1.msra.mxu0 %v1388
        %1410 = vmatprep.subr.mxu0 0.0
        %1411 = vmatpush1.msra.mxu0 %v1389
        %1412 = vmatprep.subr.mxu0 0.0
        %1413 = vmatpush1.msra.mxu0 %v1390
        %1414 = vmatprep.subr.mxu0 0.0
        %1415 = vmatpush1.msra.mxu0 0.0
        %1416 = vmatprep.subr.mxu0 0.0
        %1417 = vmatpush1.msra.mxu0 0.0
        %1418 = vmatprep.subr.mxu0 0.0
        %1419 = vmatpush1.msra.mxu0 0.0
        %1420 = vmatprep.subr.mxu0 0.0
        %1421 = vmatpush1.msra.mxu0 0.0
        %1422 = vmatprep.subr.mxu0 0.0
        %1423 = vmatpush1.msra.mxu0 0.0
        %1424 = vmatprep.subr.mxu0 0.0
        %1425 = vmatpush1.msra.mxu0 0.0
        %1426 = vmatprep.subr.mxu0 0.0
        %1427 = vmatpush1.msra.mxu0 0.0
        %1428 = vmatprep.subr.mxu0 0.0
        %1429 = vmatpush1.msra.mxu0 0.0
        %1430 = vmatprep.subr.mxu0 0.0
        %1431 = vmatpush1.msra.mxu0 0.0
        %1432 = vmatprep.subr.mxu0 0.0
        %1433 = vmatpush1.msra.mxu0 0.0
        %1434 = vmatprep.subr.mxu0 0.0
        %1435 = vmatpush1.msra.mxu0 0.0
        %1436 = vmatprep.subr.mxu0 0.0
        %1437 = vmatpush1.msra.mxu0 0.0
        %1438 = vmatprep.subr.mxu0 0.0
        %1439 = vmatpush1.msra.mxu0 0.0
        %1440 = vmatprep.subr.mxu0 0.0
        %1441 = vmatpush1.msra.mxu0 0.0
        %1442 = vmatprep.subr.mxu0 0.0
        %1443 = vmatpush1.msra.mxu0 0.0
        %1444 = vmatprep.subr.mxu0 0.0
        %1445 = vmatpush1.msra.mxu0 0.0
        %1446 = vmatprep.subr.mxu0 0.0
        %1447 = vmatpush1.msra.mxu0 0.0
        %1448 = vmatprep.subr.mxu0 0.0
        %1449 = vmatpush1.msra.mxu0 0.0
        %1450 = vmatprep.subr.mxu0 0.0
        %1451 = vmatpush1.msra.mxu0 0.0
        %1452 = vmatprep.subr.mxu0 0.0
        %1453 = vmatpush1.msra.mxu0 0.0
        %1454 = vmatprep.subr.mxu0 0.0
        %1455 = vmatpush1.msra.mxu0 0.0
        %1456 = vmatprep.subr.mxu0 0.0
        %1457 = vmatpush1.msra.mxu0 0.0
        %1458 = vmatprep.subr.mxu0 0.0
        %1459 = vmatpush1.msra.mxu0 0.0
        %1460 = vmatprep.subr.mxu0 0.0
        %1461 = vmatpush1.msra.mxu0 0.0
        %1462 = vmatprep.mubr.f32.mxu0 0.0
        %1463 = vmatmul.mubr.f32.gmra.mrb[0].mxu0 %v1393
        %v1464 = vpop.f32.mrb[0].mxu0
        %v1465 = vadd.f32 0.0, %v1464
        %v1466 = vpop.f32.mrb[0].mxu0
        %1467 = vmatprep.mubr.f32.mxu0 0.0
        %1468 = vmatmul.mubr.f32.gmra.mrb[0].mxu0 %v1396
        %v1469 = vpop.f32.mrb[0].mxu0
        %v1470 = vadd.f32 0.0, %v1469
        %v1471 = vpop.f32.mrb[0].mxu0
        %1472 = vdwg.mxu0
        %v1473 = vtanh.pop %v1465
        %v1474 = vtanh.pop %v1470
        %1475 = vst.msk [vmem:[%s259] sm:$0xff] %vm303, %v1473
        %1476 = vst.msk [vmem:[%s259 + $0x8] sm:$0xff] %vm303, %v1474
        %v1477 = vlaneseq
        %v1478 = vshrl.u32 %v1477, 7
        %v1479 = vsub.s32 %v646, %v1478
        %v1480 = vrot.slane %v1138, %v1479
        %v1481 = vlaneseq
        %v1482 = vshrl.u32 %v1481, 7
        %v1483 = vsub.s32 %v646, %v1482
        %v1484 = vrot.slane %v1143, %v1483
        %v1485 = vlaneseq
        %v1486 = vshrl.u32 %v1485, 7
        %v1487 = vsub.s32 %v646, %v1486
        %v1488 = vrot.slane %v1148, %v1487
        %v1489 = vlaneseq
        %v1490 = vshrl.u32 %v1489, 7
        %v1491 = vsub.s32 %v646, %v1490
        %v1492 = vrot.slane %v1153, %v1491
        %v1493 = vlaneseq
        %v1494 = vshrl.u32 %v1493, 7
        %v1495 = vsub.s32 %v646, %v1494
        %v1496 = vrot.slane %v1158, %v1495
        %v1497 = vlaneseq
        %v1498 = vshrl.u32 %v1497, 7
        %v1499 = vsub.s32 %v646, %v1498
        %v1500 = vrot.slane %v1163, %v1499
        %v1501 = vlaneseq
        %v1502 = vshrl.u32 %v1501, 7
        %v1503 = vsub.s32 %v646, %v1502
        %v1504 = vrot.slane %v1168, %v1503
        %v1505 = vlaneseq
        %v1506 = vshrl.u32 %v1505, 7
        %v1507 = vsub.s32 %v646, %v1506
        %v1508 = vrot.slane %v1173, %v1507
        %v1509 = vlaneseq
        %v1510 = vshrl.u32 %v1509, 7
        %v1511 = vsub.s32 %v646, %v1510
        %v1512 = vrot.slane %v1178, %v1511
        %v1513 = vlaneseq
        %v1514 = vshrl.u32 %v1513, 7
        %v1515 = vsub.s32 %v646, %v1514
        %v1516 = vrot.slane %v1183, %v1515
        %v1517 = vlaneseq
        %v1518 = vshrl.u32 %v1517, 7
        %v1519 = vsub.s32 %v646, %v1518
        %v1520 = vrot.slane %v1188, %v1519
        %v1521 = vlaneseq
        %v1522 = vshrl.u32 %v1521, 7
        %v1523 = vsub.s32 %v646, %v1522
        %v1524 = vrot.slane %v1193, %v1523
        %v1525 = vlaneseq
        %v1526 = vshrl.u32 %v1525, 7
        %v1527 = vsub.s32 %v646, %v1526
        %v1528 = vrot.slane %v1198, %v1527
        %v1529 = vlaneseq
        %v1530 = vshrl.u32 %v1529, 7
        %v1531 = vsub.s32 %v646, %v1530
        %v1532 = vrot.slane %v1203, %v1531
        %v1533 = vlaneseq
        %v1534 = vshrl.u32 %v1533, 7
        %v1535 = vsub.s32 %v646, %v1534
        %v1536 = vrot.slane %v1208, %v1535
        %v1537 = vlaneseq
        %v1538 = vshrl.u32 %v1537, 7
        %v1539 = vsub.s32 %v646, %v1538
        %v1540 = vrot.slane %v1213, %v1539
        %v1541 = vsel %vm711, %v1484, %v1480
        %v1542 = vsel %vm713, %v1488, %v1541
        %v1543 = vsel %vm715, %v1492, %v1542
        %v1544 = vsel %vm717, %v1496, %v1543
        %v1545 = vsel %vm719, %v1500, %v1544
        %v1546 = vsel %vm721, %v1504, %v1545
        %v1547 = vsel %vm723, %v1508, %v1546
        %v1548 = vsel %vm711, %v1516, %v1512
        %v1549 = vsel %vm713, %v1520, %v1548
        %v1550 = vsel %vm715, %v1524, %v1549
        %v1551 = vsel %vm717, %v1528, %v1550
        %v1552 = vsel %vm719, %v1532, %v1551
        %v1553 = vsel %vm721, %v1536, %v1552
        %v1554 = vsel %vm723, %v1540, %v1553
        %1557 = vst.msk [vmem:[%s279] sm:$0xff] %vm734, %v1547
        %1558 = vst.msk [vmem:[%s279 + $0x8] sm:$0xff] %vm734, %v1554
        %s1559 = sand.u32 %s125, 1
        %s1560 = scalar_lea.sflag [#allocation4], %s1559
        %s1561 = sand.u32 %s125, 1
        %s1562 = smul.addr %s1561, 16
        %s1563 = scalar_lea.vmem [#allocation5], %s1562
        %s1564 = smul.u32 2, %s23
        %p1565 = scmp.lt.s32.totalorder %s1564, 3
        %s1566 = scalar_select %p1565, %s1564, 3
        %s1567 = smul.addr %s1566, 8
        %s1568 = scalar_lea.vmem %s5, %s1567
        // Predicated region
        $region41: #{tpu_custom_call.1} parent=35 // pred_check
          %p1569 = pneg %p135
        $region42: #{tpu_custom_call.1} parent=35 // pred_check_branch
          %1571 = sbr.rel (%p1569) target = $region44
        $region43: #{tpu_custom_call.1} parent=35 // pred_region
          %s1572 = smul.u32 2, %s23
          %s1574 = ssub.s32 256, 256
          %1575 = vsyncadd %s1560, %s1574
          %s1576 = smul.addr %s1572, 128
          %s1577 = scalar_lea.hbm %s4, %s1576
          %s1578 = sshll.u32 %s1563, 4
          %s1579 = int_to_ptr.vmem [resolvable:$true] %s1578
          %1584 = dma.vmem_to_hbm [thread:$0]  %s1579, 256, %s1577, %s1560, 128, 128, 8
        $region44: #{tpu_custom_call.1} parent=35 // pred_fallthru
          _
        // Predicated region
        $region45: #{tpu_custom_call.1} parent=35 // pred_check
          %p1585 = pneg %p161
        $region46: #{tpu_custom_call.1} parent=35 // pred_check_branch
          %1587 = sbr.rel (%p1585) target = $region48
        $region47: #{tpu_custom_call.1} parent=35 // pred_region
          %s1588 = smul.u32 2, %s23
        $region48: #{tpu_custom_call.1} parent=35 // pred_fallthru
          _
      $region36: #{tpu_custom_call.1} parent=5 // pred_fallthru
        _
      %p1589 = scmp.le.s32.totalorder 2, %s18
      // Predicated region
      $region49: #{tpu_custom_call.1} parent=5 // pred_check
        %p1590 = pneg %p1589
      $region50: #{tpu_custom_call.1} parent=5 // pred_check_branch
        %1592 = sbr.rel (%p1590) target = $region52
      $region51: #{tpu_custom_call.1} parent=5 // pred_region
        %s1593 = ssub.s32 %s18, 2
        // Predicated region
        $region53: #{tpu_custom_call.1} parent=51 // pred_check
          %p1594 = pneg %p141
        $region54: #{tpu_custom_call.1} parent=51 // pred_check_branch
          %1596 = sbr.rel (%p1594) target = $region56
        $region55: #{tpu_custom_call.1} parent=51 // pred_region
          %s1597 = sand.u32 %s126, 1
          %s1598 = scalar_lea.sflag [#allocation4], %s1597
          %s1599 = sand.u32 %s126, 1
          %s1600 = smul.addr %s1599, 16
          %s1601 = scalar_lea.vmem [#allocation5], %s1600
          %1602 = dma.done %s1598, 256
        $region56: #{tpu_custom_call.1} parent=51 // pred_fallthru
          _
        // Predicated region
        $region57: #{tpu_custom_call.1} parent=51 // pred_check
          %p1603 = pneg %p167
        $region58: #{tpu_custom_call.1} parent=51 // pred_check_branch
          %1605 = sbr.rel (%p1603) target = $region60
        $region59: #{tpu_custom_call.1} parent=51 // pred_region
          %s1606 = smul.u32 2, %s24
          %p1607 = scmp.lt.s32.totalorder %s1606, 3
          %s1608 = scalar_select %p1607, %s1606, 3
          %s1609 = smul.addr %s1608, 8
          %s1610 = scalar_lea.vmem %s5, %s1609
        $region60: #{tpu_custom_call.1} parent=51 // pred_fallthru
          _
      $region52: #{tpu_custom_call.1} parent=5 // pred_fallthru
        _
    $region6: #{tpu_custom_call.1} parent=1 // loop_footer
      %s22 = sadd.s32 1, %s18
    $region7: #{tpu_custom_call.1} parent=1 // loop_footer_branch
      %17 = sbr.rel target = $region3
    $region8: #{tpu_custom_call.1} parent=1 // loop_exit
      _
    %1611 = vsyncpa [#allocation3], 1
    %s1612 = scalar_lea.sflag [#allocation3], 1
    %1613 = vsyncpa %s1612, 1
    %1614 = vsyncpa [#allocation4], 1
    %s1615 = scalar_lea.sflag [#allocation4], 1
    %1616 = vsyncpa %s1615, 1

// kernel: tpu_custom_call.1
$region0: #{tpu_custom_call.1}
  #allocation0 [shape = 'u32[]', space=smem, size = 0x4, offset = 0x4, fixed_abs, tag = 'smem constant byte address 0x4 - core index']
  #allocation1 [shape = 'u32[144,128]{1,0:T(1,128)}', space=vmem, size = 0x12000, scoped, tag = 'internal scratch']
  %s0 = inlined_call_operand.vmem [shape: f32[32,32], index: 0, kind: input, shape index: {}]
  %s1 = inlined_call_operand.hbm [shape: f32[32,8,32], index: 1, kind: input, shape index: {}]
  %s2 = inlined_call_operand.vmem [shape: f32[32,32], index: 2, kind: input, shape index: {}]
  %s3 = inlined_call_operand.vmem [shape: f32[64,32], index: 3, kind: input, shape index: {}]
  %s4 = inlined_call_operand.hbm [shape: f32[32,32], index: 4, kind: output, shape index: {0}]
  %s5 = inlined_call_operand.vmem [shape: f32[32,8], index: 5, kind: output, shape index: {1}]
  %6 = xla_tuple %s4, %s5
  %s7 = sld [smem:[#allocation0]]
  $region61: #{tpu_custom_call.1} parent=0
    _
  %s9 = ssub.s32 1, %s7
  %s10 = scalar_select 0, %s9, %s7
  $region1: #{tpu_custom_call.1} parent=0
    #allocation2 [shape = 'u8[131072]{0}', space=vmem, size = 0x20000, scoped, tag = 'input window, operand 1']
    #allocation3 [shape = 's32[2]{0}', space=sflag, size = 0x8, scoped, tag = 'scoped memory for tpu_custom_call.1']
    #allocation4 [shape = 's32[2]{0}', space=sflag, size = 0x8, scoped, tag = 'scoped memory for tpu_custom_call.1']
    #allocation5 [shape = 'u8[16384]{0}', space=vmem, size = 0x4000, scoped, tag = 'output window, operand 0']
    %11 = vsyncpa [#allocation3], 0
    %s12 = scalar_lea.sflag [#allocation3], 1
    %13 = vsyncpa %s12, 0
    %14 = vsyncpa [#allocation4], 0
    %s15 = scalar_lea.sflag [#allocation4], 1
    %16 = vsyncpa %s15, 0
    loop: start=0, step=1, limit=4
    $region2: #{tpu_custom_call.1} parent=1 // loop_pre_header
      _
    $region3: #{tpu_custom_call.1} parent=1 // loop_header
      %s18 = sphi 0, %s22
      %p19 = scmp.ge.s32.totalorder %s18, 4
      %s28 = sphi 0, %s30
      %s31 = sphi 0, %s28
      %s32 = sphi 0, %s31
      %s48 = sphi 0, %s32
      %s54 = sphi 0, %s56
      %s57 = sphi 0, %s54
      %s58 = sphi 0, %s57
      %s74 = sphi 0, %s58
      %s78 = sphi 0, %s78
      %s80 = sphi 0, %s78
      %s81 = sphi 0, %s80
      %s95 = sphi 0, %s81
      %s99 = sphi 0, %s99
      %s101 = sphi 0, %s99
      %s102 = sphi 0, %s101
      %s116 = sphi 0, %s102
      %s122 = sphi 0, %s124
      %s125 = sphi 0, %s122
      %s126 = sphi 0, %s125
      %s142 = sphi 0, %s126
      %s148 = sphi 0, %s150
      %s151 = sphi 0, %s148
      %s152 = sphi 0, %s151
      %s168 = sphi 0, %s152
    $region4: #{tpu_custom_call.1} parent=1 // loop_header_branch
      %21 = sbr.rel (%p19) target = $region8
    $region5: #{tpu_custom_call.1} parent=1 // loop_body
      %s23 = ssub.s32 %s18, 1
      %s24 = ssub.s32 %s18, 2
      %s25 = sadd.s32 %s18, 1
      %s26 = ssub.s32 %s18, %s25
      %p27 = scmp.eq.s32.totalorder %s26, 0
      %s29 = sadd.s32 %s28, 1
      %s30 = scalar_select %p27, %s28, %s29
      %p33 = pneg %p27
      %p34 = scmp.eq.s32.totalorder %s18, 1
      %p35 = por %p33, %p34
      %p36 = scmp.ne.s32.totalorder %s28, %s31
      %p37 = scmp.eq.s32.totalorder %s18, 0
      %p38 = por %p36, %p37
      %p39 = scmp.ne.s32.totalorder %s28, %s31
      %p40 = scmp.eq.s32.totalorder %s23, 1
      %p41 = por %p39, %p40
      %p42 = scmp.ne.s32.totalorder %s31, %s32
      %p43 = scmp.eq.s32.totalorder %s23, 0
      %p44 = por %p42, %p43
      %p45 = scmp.ne.s32.totalorder %s31, %s32
      %p46 = scmp.eq.s32.totalorder %s24, 1
      %p47 = por %p45, %p46
      %p49 = scmp.ne.s32.totalorder %s32, %s48
      %p50 = scmp.eq.s32.totalorder %s24, 0
      %p51 = por %p49, %p50
      %s52 = ssub.s32 %s18, %s25
      %p53 = scmp.eq.s32.totalorder %s52, 0
      %s55 = sadd.s32 %s54, 1
      %s56 = scalar_select %p53, %s54, %s55
      %p59 = pneg %p53
      %p60 = scmp.eq.s32.totalorder %s18, 1
      %p61 = por %p59, %p60
      %p62 = scmp.ne.s32.totalorder %s54, %s57
      %p63 = scmp.eq.s32.totalorder %s18, 0
      %p64 = por %p62, %p63
      %p65 = scmp.ne.s32.totalorder %s54, %s57
      %p66 = scmp.eq.s32.totalorder %s23, 1
      %p67 = por %p65, %p66
      %p68 = scmp.ne.s32.totalorder %s57, %s58
      %p69 = scmp.eq.s32.totalorder %s23, 0
      %p70 = por %p68, %p69
      %p71 = scmp.ne.s32.totalorder %s57, %s58
      %p72 = scmp.eq.s32.totalorder %s24, 1
      %p73 = por %p71, %p72
      %p75 = scmp.ne.s32.totalorder %s58, %s74
      %p76 = scmp.eq.s32.totalorder %s24, 0
      %p77 = por %p75, %p76
      %s79 = sadd.s32 %s78, 1
      %p82 = scmp.eq.s32.totalorder %s18, 1
      %p83 = scmp.ne.s32.totalorder %s78, %s80
      %p84 = scmp.eq.s32.totalorder %s18, 0
      %p85 = por %p83, %p84
      %p86 = scmp.ne.s32.totalorder %s78, %s80
      %p87 = scmp.eq.s32.totalorder %s23, 1
      %p88 = por %p86, %p87
      %p89 = scmp.ne.s32.totalorder %s80, %s81
      %p90 = scmp.eq.s32.totalorder %s23, 0
      %p91 = por %p89, %p90
      %p92 = scmp.ne.s32.totalorder %s80, %s81
      %p93 = scmp.eq.s32.totalorder %s24, 1
      %p94 = por %p92, %p93
      %p96 = scmp.ne.s32.totalorder %s81, %s95
      %p97 = scmp.eq.s32.totalorder %s24, 0
      %p98 = por %p96, %p97
      %s100 = sadd.s32 %s99, 1
      %p103 = scmp.eq.s32.totalorder %s18, 1
      %p104 = scmp.ne.s32.totalorder %s99, %s101
      %p105 = scmp.eq.s32.totalorder %s18, 0
      %p106 = por %p104, %p105
      %p107 = scmp.ne.s32.totalorder %s99, %s101
      %p108 = scmp.eq.s32.totalorder %s23, 1
      %p109 = por %p107, %p108
      %p110 = scmp.ne.s32.totalorder %s101, %s102
      %p111 = scmp.eq.s32.totalorder %s23, 0
      %p112 = por %p110, %p111
      %p113 = scmp.ne.s32.totalorder %s101, %s102
      %p114 = scmp.eq.s32.totalorder %s24, 1
      %p115 = por %p113, %p114
      %p117 = scmp.ne.s32.totalorder %s102, %s116
      %p118 = scmp.eq.s32.totalorder %s24, 0
      %p119 = por %p117, %p118
      %s120 = ssub.s32 %s18, %s25
      %p121 = scmp.eq.s32.totalorder %s120, 0
      %s123 = sadd.s32 %s122, 1
      %s124 = scalar_select %p121, %s122, %s123
      %p127 = pneg %p121
      %p128 = scmp.eq.s32.totalorder %s18, 1
      %p129 = por %p127, %p128
      %p130 = scmp.ne.s32.totalorder %s122, %s125
      %p131 = scmp.eq.s32.totalorder %s18, 0
      %p132 = por %p130, %p131
      %p133 = scmp.ne.s32.totalorder %s122, %s125
      %p134 = scmp.eq.s32.totalorder %s23, 1
      %p135 = por %p133, %p134
      %p136 = scmp.ne.s32.totalorder %s125, %s126
      %p137 = scmp.eq.s32.totalorder %s23, 0
      %p138 = por %p136, %p137
      %p139 = scmp.ne.s32.totalorder %s125, %s126
      %p140 = scmp.eq.s32.totalorder %s24, 1
      %p141 = por %p139, %p140
      %p143 = scmp.ne.s32.totalorder %s126, %s142
      %p144 = scmp.eq.s32.totalorder %s24, 0
      %p145 = por %p143, %p144
      %s146 = ssub.s32 %s18, %s25
      %p147 = scmp.eq.s32.totalorder %s146, 0
      %s149 = sadd.s32 %s148, 1
      %s150 = scalar_select %p147, %s148, %s149
      %p153 = pneg %p147
      %p154 = scmp.eq.s32.totalorder %s18, 1
      %p155 = por %p153, %p154
      %p156 = scmp.ne.s32.totalorder %s148, %s151
      %p157 = scmp.eq.s32.totalorder %s18, 0
      %p158 = por %p156, %p157
      %p159 = scmp.ne.s32.totalorder %s148, %s151
      %p160 = scmp.eq.s32.totalorder %s23, 1
      %p161 = por %p159, %p160
      %p162 = scmp.ne.s32.totalorder %s151, %s152
      %p163 = scmp.eq.s32.totalorder %s23, 0
      %p164 = por %p162, %p163
      %p165 = scmp.ne.s32.totalorder %s151, %s152
      %p166 = scmp.eq.s32.totalorder %s24, 1
      %p167 = por %p165, %p166
      %p169 = scmp.ne.s32.totalorder %s152, %s168
      %p170 = scmp.eq.s32.totalorder %s24, 0
      %p171 = por %p169, %p170
      %p172 = scmp.le.s32.totalorder 1, %s18
      %p173 = scmp.lt.s32.totalorder %s18, 3
      %p174 = pnand %p172, %p173
      %p175 = pneg %p174
      // Predicated region
      $region9: #{tpu_custom_call.1} parent=5 // pred_check
        _
      $region10: #{tpu_custom_call.1} parent=5 // pred_check_branch
        %177 = sbr.rel (%p174) target = $region12
      $region11: #{tpu_custom_call.1} parent=5 // pred_region
        %s178 = ssub.s32 %s18, 1
        // Predicated region
        $region13: #{tpu_custom_call.1} parent=11 // pred_check
          %p179 = pneg %p91
        $region14: #{tpu_custom_call.1} parent=11 // pred_check_branch
          %181 = sbr.rel (%p179) target = $region16
        $region15: #{tpu_custom_call.1} parent=11 // pred_region
          _
        $region16: #{tpu_custom_call.1} parent=11 // pred_fallthru
          _
        // Predicated region
        $region17: #{tpu_custom_call.1} parent=11 // pred_check
          %p182 = pneg %p112
        $region18: #{tpu_custom_call.1} parent=11 // pred_check_branch
          %184 = sbr.rel (%p182) target = $region20
        $region19: #{tpu_custom_call.1} parent=11 // pred_region
          _
        $region20: #{tpu_custom_call.1} parent=11 // pred_fallthru
          _
      $region12: #{tpu_custom_call.1} parent=5 // pred_fallthru
        _
      %p185 = scmp.lt.s32.totalorder %s18, 2
      // Predicated region
      $region21: #{tpu_custom_call.1} parent=5 // pred_check
        %p186 = pneg %p185
      $region22: #{tpu_custom_call.1} parent=5 // pred_check_branch
        %188 = sbr.rel (%p186) target = $region24
      $region23: #{tpu_custom_call.1} parent=5 // pred_region
        // Predicated region
        $region25: #{tpu_custom_call.1} parent=23 // pred_check
          %p189 = pneg %p38
        $region26: #{tpu_custom_call.1} parent=23 // pred_check_branch
          %191 = sbr.rel (%p189) target = $region28
        $region27: #{tpu_custom_call.1} parent=23 // pred_region
          %s192 = smul.u32 2, %s18
          %p193 = scmp.lt.s32.totalorder %s192, 3
          %s194 = scalar_select %p193, %s192, 3
          %s195 = smul.addr %s194, 8
          %s196 = scalar_lea.vmem %s0, %s195
          %s197 = smul.u32 2, %s18
        $region28: #{tpu_custom_call.1} parent=23 // pred_fallthru
          _
        // Predicated region
        $region29: #{tpu_custom_call.1} parent=23 // pred_check
          %p198 = pneg %p64
        $region30: #{tpu_custom_call.1} parent=23 // pred_check_branch
          %200 = sbr.rel (%p198) target = $region32
        $region31: #{tpu_custom_call.1} parent=23 // pred_region
          %s201 = sand.u32 %s54, 1
          %s202 = scalar_lea.sflag [#allocation3], %s201
          %s203 = sand.u32 %s54, 1
          %s204 = smul.addr %s203, 128
          %s205 = scalar_lea.vmem [#allocation2], %s204
          %s206 = smul.u32 16, %s18
          %s208 = ssub.s32 2048, 2048
          %209 = vsyncadd %s202, %s208
          %s210 = smul.addr %s206, 128
          %s211 = scalar_lea.hbm %s1, %s210
          %s212 = sshll.u32 %s205, 4
          %s213 = int_to_ptr.vmem [resolvable:$true] %s212
          %218 = dma.hbm_to_vmem [thread:$0]  %s211, 2048, %s213, %s202, 128, 128, 8
        $region32: #{tpu_custom_call.1} parent=23 // pred_fallthru
          _
      $region24: #{tpu_custom_call.1} parent=5 // pred_fallthru
        _
      %p219 = scmp.le.s32.totalorder 1, %s18
      %p220 = scmp.lt.s32.totalorder %s18, 3
      %p221 = pnand %p219, %p220
      %p222 = pneg %p221
      // Predicated region
      $region33: #{tpu_custom_call.1} parent=5 // pred_check
        _
      $region34: #{tpu_custom_call.1} parent=5 // pred_check_branch
        %224 = sbr.rel (%p221) target = $region36
      $region35: #{tpu_custom_call.1} parent=5 // pred_region
        %s225 = ssub.s32 %s18, 1
        %s226 = sand.u32 %s57, 1
        %s227 = scalar_lea.sflag [#allocation3], %s226
        %s228 = sand.u32 %s57, 1
        %s229 = smul.addr %s228, 128
        %s230 = scalar_lea.vmem [#allocation2], %s229
        // Predicated region
        $region37: #{tpu_custom_call.1} parent=35 // pred_check
          %p231 = pneg %p70
        $region38: #{tpu_custom_call.1} parent=35 // pred_check_branch
          %233 = sbr.rel (%p231) target = $region40
        $region39: #{tpu_custom_call.1} parent=35 // pred_region
          %234 = dma.done %s227, 2048
        $region40: #{tpu_custom_call.1} parent=35 // pred_fallthru
          _
        %s235 = smul.u32 2, %s23
        %p236 = scmp.lt.s32.totalorder %s235, 3
        %s237 = scalar_select %p236, %s235, 3
        %s238 = smul.addr %s237, 8
        %s239 = scalar_lea.vmem %s0, %s238
        %p240 = pneg %p44
        %p241 = pneg %p41
        %s242 = sand.u32 %s57, 1
        %s243 = scalar_lea.sflag [#allocation3], %s242
        %s244 = sand.u32 %s57, 1
        %s245 = smul.addr %s244, 128
        %s246 = scalar_lea.vmem [#allocation2], %s245
        %p247 = pneg %p70
        %p248 = pneg %p67
        %p249 = pneg %p91
        %p250 = pneg %p88
        %p251 = pneg %p112
        %p252 = pneg %p109
        %p253 = pneg %p138
        %p254 = pneg %p135
        %s255 = sand.u32 %s125, 1
        %s256 = scalar_lea.sflag [#allocation4], %s255
        %s257 = sand.u32 %s125, 1
        %s258 = smul.addr %s257, 16
        %s259 = scalar_lea.vmem [#allocation5], %s258
        %p260 = pneg %p164
        %p261 = pneg %p161
        %s262 = smul.u32 2, %s23
        %p263 = scmp.lt.s32.totalorder %s262, 3
        %s264 = scalar_select %p263, %s262, 3
        %s265 = smul.addr %s264, 8
        %s266 = scalar_lea.vmem %s5, %s265
        %s267 = smul.u32 2, %s23
        %p268 = scmp.lt.s32.totalorder %s267, 3
        %s269 = scalar_select %p268, %s267, 3
        %s270 = smul.addr %s269, 8
        %s271 = scalar_lea.vmem %s0, %s270
        %s272 = smul.u32 2, %s23
        %s273 = smul.u32 16, %s23
        %s274 = smul.u32 2, %s23
        %s275 = smul.u32 2, %s23
        %p276 = scmp.lt.s32.totalorder %s275, 3
        %s277 = scalar_select %p276, %s275, 3
        %s278 = smul.addr %s277, 8
        %s279 = scalar_lea.vmem %s5, %s278
        %s280 = smul.u32 2, %s23
        %v281 = vld [vmem:[%s271] sm:$0xff]
        %v282 = vld [vmem:[%s271 + $0x8] sm:$0xff]
        %v283 = vld [vmem:[%s230] sm:$0xff]
        %v284 = vld [vmem:[%s230 + $0x8] sm:$0xff]
        %v285 = vld [vmem:[%s230 + $0x10] sm:$0xff]
        %v286 = vld [vmem:[%s230 + $0x18] sm:$0xff]
        %v287 = vld [vmem:[%s230 + $0x20] sm:$0xff]
        %v288 = vld [vmem:[%s230 + $0x28] sm:$0xff]
        %v289 = vld [vmem:[%s230 + $0x30] sm:$0xff]
        %v290 = vld [vmem:[%s230 + $0x38] sm:$0xff]
        %v291 = vld [vmem:[%s230 + $0x40] sm:$0xff]
        %v292 = vld [vmem:[%s230 + $0x48] sm:$0xff]
        %v293 = vld [vmem:[%s230 + $0x50] sm:$0xff]
        %v294 = vld [vmem:[%s230 + $0x58] sm:$0xff]
        %v295 = vld [vmem:[%s230 + $0x60] sm:$0xff]
        %v296 = vld [vmem:[%s230 + $0x68] sm:$0xff]
        %v297 = vld [vmem:[%s230 + $0x70] sm:$0xff]
        %v298 = vld [vmem:[%s230 + $0x78] sm:$0xff]
        %v299 = vld [vmem:[%s2] sm:$0xff]
        %v300 = vld [vmem:[%s2 + $0x8] sm:$0xff]
        %v301 = vld [vmem:[%s2 + $0x10] sm:$0xff]
        %v302 = vld [vmem:[%s2 + $0x18] sm:$0xff]
        %vm303 = vcmask 261120
        %v305 = vsel %vm303, %v281, 0
        %v308 = vsel %vm303, %v282, 0
        %310 = vmatprep.subr.mxu0 0.0
        %311 = vmatpush1.msra.mxu0 %v299
        %312 = vmatprep.subr.mxu0 0.0
        %313 = vmatpush1.msra.mxu0 %v300
        %314 = vmatprep.subr.mxu0 0.0
        %315 = vmatpush1.msra.mxu0 %v301
        %316 = vmatprep.subr.mxu0 0.0
        %317 = vmatpush1.msra.mxu0 %v302
        %318 = vmatprep.subr.mxu0 0.0
        %319 = vmatpush1.msra.mxu0 0.0
        %320 = vmatprep.subr.mxu0 0.0
        %321 = vmatpush1.msra.mxu0 0.0
        %322 = vmatprep.subr.mxu0 0.0
        %323 = vmatpush1.msra.mxu0 0.0
        %324 = vmatprep.subr.mxu0 0.0
        %325 = vmatpush1.msra.mxu0 0.0
        %326 = vmatprep.subr.mxu0 0.0
        %327 = vmatpush1.msra.mxu0 0.0
        %328 = vmatprep.subr.mxu0 0.0
        %329 = vmatpush1.msra.mxu0 0.0
        %330 = vmatprep.subr.mxu0 0.0
        %331 = vmatpush1.msra.mxu0 0.0
        %332 = vmatprep.subr.mxu0 0.0
        %333 = vmatpush1.msra.mxu0 0.0
        %334 = vmatprep.subr.mxu0 0.0
        %335 = vmatpush1.msra.mxu0 0.0
        %336 = vmatprep.subr.mxu0 0.0
        %337 = vmatpush1.msra.mxu0 0.0
        %338 = vmatprep.subr.mxu0 0.0
        %339 = vmatpush1.msra.mxu0 0.0
        %340 = vmatprep.subr.mxu0 0.0
        %341 = vmatpush1.msra.mxu0 0.0
        %342 = vmatprep.subr.mxu0 0.0
        %343 = vmatpush1.msra.mxu0 0.0
        %344 = vmatprep.subr.mxu0 0.0
        %345 = vmatpush1.msra.mxu0 0.0
        %346 = vmatprep.subr.mxu0 0.0
        %347 = vmatpush1.msra.mxu0 0.0
        %348 = vmatprep.subr.mxu0 0.0
        %349 = vmatpush1.msra.mxu0 0.0
        %350 = vmatprep.subr.mxu0 0.0
        %351 = vmatpush1.msra.mxu0 0.0
        %352 = vmatprep.subr.mxu0 0.0
        %353 = vmatpush1.msra.mxu0 0.0
        %354 = vmatprep.subr.mxu0 0.0
        %355 = vmatpush1.msra.mxu0 0.0
        %356 = vmatprep.subr.mxu0 0.0
        %357 = vmatpush1.msra.mxu0 0.0
        %358 = vmatprep.subr.mxu0 0.0
        %359 = vmatpush1.msra.mxu0 0.0
        %360 = vmatprep.subr.mxu0 0.0
        %361 = vmatpush1.msra.mxu0 0.0
        %362 = vmatprep.subr.mxu0 0.0
        %363 = vmatpush1.msra.mxu0 0.0
        %364 = vmatprep.subr.mxu0 0.0
        %365 = vmatpush1.msra.mxu0 0.0
        %366 = vmatprep.subr.mxu0 0.0
        %367 = vmatpush1.msra.mxu0 0.0
        %368 = vmatprep.subr.mxu0 0.0
        %369 = vmatpush1.msra.mxu0 0.0
        %370 = vmatprep.subr.mxu0 0.0
        %371 = vmatpush1.msra.mxu0 0.0
        %372 = vmatprep.subr.mxu0 0.0
        %373 = vmatpush1.msra.mxu0 0.0
        %374 = vmatprep.mubr.f32.mxu0 0.0
        %375 = vmatmul.mubr.f32.gmra.mrb[0].mxu0 %v305
        %v376 = vpop.f32.mrb[0].mxu0
        %v377 = vadd.f32 0.0, %v376
        %v378 = vpop.f32.mrb[0].mxu0
        %379 = vmatprep.mubr.f32.mxu0 0.0
        %380 = vmatmul.mubr.f32.gmra.mrb[0].mxu0 %v308
        %v381 = vpop.f32.mrb[0].mxu0
        %v382 = vadd.f32 0.0, %v381
        %v383 = vpop.f32.mrb[0].mxu0
        %384 = vdwg.mxu0
        %v387 = vcombine.high %v377, %v377
        %v389 = vunpack.c.l.s4 1966171168
        %v390 = vunpack.c.0.s8 %v389
        %v391 = vlaneseq
        %v392 = vshrl.u32 %v391, 7
        %v393 = vsub.s32 %v390, %v392
        %v394 = vrot.slane %v377, %v393
        %v396 = vunpack.c.l.s4 1966171168
        %v397 = vunpack.c.0.s8 %v396
        %v398 = vlaneseq
        %v399 = vshrl.u32 %v398, 7
        %v400 = vsub.s32 %v397, %v399
        %v401 = vrot.slane %v387, %v400
        %v402 = vcombine.high %v394, %v394
        %v403 = vcombine.high %v401, %v401
        %v405 = vunpack.c.l.s4 1966171168
        %v406 = vunpack.c.0.s8 %v405
        %v407 = vlaneseq
        %v408 = vshrl.u32 %v407, 7
        %v409 = vsub.s32 %v406, %v408
        %v410 = vrot.slane %v394, %v409
        %v412 = vunpack.c.l.s4 1966171168
        %v413 = vunpack.c.0.s8 %v412
        %v414 = vlaneseq
        %v415 = vshrl.u32 %v414, 7
        %v416 = vsub.s32 %v413, %v415
        %v417 = vrot.slane %v401, %v416
        %v419 = vunpack.c.l.s4 1966171168
        %v420 = vunpack.c.0.s8 %v419
        %v421 = vlaneseq
        %v422 = vshrl.u32 %v421, 7
        %v423 = vsub.s32 %v420, %v422
        %v424 = vrot.slane %v402, %v423
        %v426 = vunpack.c.l.s4 1966171168
        %v427 = vunpack.c.0.s8 %v426
        %v428 = vlaneseq
        %v429 = vshrl.u32 %v428, 7
        %v430 = vsub.s32 %v427, %v429
        %v431 = vrot.slane %v403, %v430
        %v432 = vcombine.high %v410, %v410
        %v433 = vcombine.high %v417, %v417
        %v434 = vcombine.high %v424, %v424
        %v435 = vcombine.high %v431, %v431
        %v436 = vcombine.high %v382, %v382
        %v438 = vunpack.c.l.s4 1966171168
        %v439 = vunpack.c.0.s8 %v438
        %v440 = vlaneseq
        %v441 = vshrl.u32 %v440, 7
        %v442 = vsub.s32 %v439, %v441
        %v443 = vrot.slane %v382, %v442
        %v445 = vunpack.c.l.s4 1966171168
        %v446 = vunpack.c.0.s8 %v445
        %v447 = vlaneseq
        %v448 = vshrl.u32 %v447, 7
        %v449 = vsub.s32 %v446, %v448
        %v450 = vrot.slane %v436, %v449
        %v451 = vcombine.high %v443, %v443
        %v452 = vcombine.high %v450, %v450
        %v454 = vunpack.c.l.s4 1966171168
        %v455 = vunpack.c.0.s8 %v454
        %v456 = vlaneseq
        %v457 = vshrl.u32 %v456, 7
        %v458 = vsub.s32 %v455, %v457
        %v459 = vrot.slane %v443, %v458
        %v461 = vunpack.c.l.s4 1966171168
        %v462 = vunpack.c.0.s8 %v461
        %v463 = vlaneseq
        %v464 = vshrl.u32 %v463, 7
        %v465 = vsub.s32 %v462, %v464
        %v466 = vrot.slane %v450, %v465
        %v468 = vunpack.c.l.s4 1966171168
        %v469 = vunpack.c.0.s8 %v468
        %v470 = vlaneseq
        %v471 = vshrl.u32 %v470, 7
        %v472 = vsub.s32 %v469, %v471
        %v473 = vrot.slane %v451, %v472
        %v475 = vunpack.c.l.s4 1966171168
        %v476 = vunpack.c.0.s8 %v475
        %v477 = vlaneseq
        %v478 = vshrl.u32 %v477, 7
        %v479 = vsub.s32 %v476, %v478
        %v480 = vrot.slane %v452, %v479
        %v481 = vcombine.high %v459, %v459
        %v482 = vcombine.high %v466, %v466
        %v483 = vcombine.high %v473, %v473
        %v484 = vcombine.high %v480, %v480
        %v485 = vlaneseq
        %v486 = vshrl.u32 %v485, 7
        %v487 = vsub.s32 0, %v486
        %v488 = vrot.slane %v410, %v487
        %v489 = vlaneseq
        %v490 = vshrl.u32 %v489, 7
        %v491 = vsub.s32 0, %v490
        %v492 = vrot.slane %v424, %v491
        %v493 = vlaneseq
        %v494 = vshrl.u32 %v493, 7
        %v495 = vsub.s32 0, %v494
        %v496 = vrot.slane %v432, %v495
        %v497 = vlaneseq
        %v498 = vshrl.u32 %v497, 7
        %v499 = vsub.s32 0, %v498
        %v500 = vrot.slane %v434, %v499
        %v501 = vlaneseq
        %v502 = vshrl.u32 %v501, 7
        %v503 = vsub.s32 0, %v502
        %v504 = vrot.slane %v417, %v503
        %v505 = vlaneseq
        %v506 = vshrl.u32 %v505, 7
        %v507 = vsub.s32 0, %v506
        %v508 = vrot.slane %v431, %v507
        %v509 = vlaneseq
        %v510 = vshrl.u32 %v509, 7
        %v511 = vsub.s32 0, %v510
        %v512 = vrot.slane %v433, %v511
        %v513 = vlaneseq
        %v514 = vshrl.u32 %v513, 7
        %v515 = vsub.s32 0, %v514
        %v516 = vrot.slane %v435, %v515
        %v517 = vlaneseq
        %v518 = vshrl.u32 %v517, 7
        %v519 = vsub.s32 0, %v518
        %v520 = vrot.slane %v459, %v519
        %v521 = vlaneseq
        %v522 = vshrl.u32 %v521, 7
        %v523 = vsub.s32 0, %v522
        %v524 = vrot.slane %v473, %v523
        %v525 = vlaneseq
        %v526 = vshrl.u32 %v525, 7
        %v527 = vsub.s32 0, %v526
        %v528 = vrot.slane %v481, %v527
        %v529 = vlaneseq
        %v530 = vshrl.u32 %v529, 7
        %v531 = vsub.s32 0, %v530
        %v532 = vrot.slane %v483, %v531
        %v533 = vlaneseq
        %v534 = vshrl.u32 %v533, 7
        %v535 = vsub.s32 0, %v534
        %v536 = vrot.slane %v466, %v535
        %v537 = vlaneseq
        %v538 = vshrl.u32 %v537, 7
        %v539 = vsub.s32 0, %v538
        %v540 = vrot.slane %v480, %v539
        %v541 = vlaneseq
        %v542 = vshrl.u32 %v541, 7
        %v543 = vsub.s32 0, %v542
        %v544 = vrot.slane %v482, %v543
        %v545 = vlaneseq
        %v546 = vshrl.u32 %v545, 7
        %v547 = vsub.s32 0, %v546
        %v548 = vrot.slane %v484, %v547
        %v565 = vmul.f32 %v283, %v488
        %v566 = vmul.f32 %v284, %v492
        %v567 = vmul.f32 %v285, %v496
        %v568 = vmul.f32 %v286, %v500
        %v569 = vmul.f32 %v287, %v504
        %v570 = vmul.f32 %v288, %v508
        %v571 = vmul.f32 %v289, %v512
        %v572 = vmul.f32 %v290, %v516
        %v573 = vmul.f32 %v291, %v520
        %v574 = vmul.f32 %v292, %v524
        %v575 = vmul.f32 %v293, %v528
        %v576 = vmul.f32 %v294, %v532
        %v577 = vmul.f32 %v295, %v536
        %v578 = vmul.f32 %v296, %v540
        %v579 = vmul.f32 %v297, %v544
        %v580 = vmul.f32 %v298, %v548
        %v581 = vsel %vm303, %v565, 0.0
        %582 = vadd.xlane.f32.xlu0 %v581
        %v583 = vpop.xlane.xlu0 %582
        %v584 = vsel %vm303, %v566, 0.0
        %585 = vadd.xlane.f32.xlu0 %v584
        %v586 = vpop.xlane.xlu0 %585
        %v587 = vsel %vm303, %v567, 0.0
        %588 = vadd.xlane.f32.xlu0 %v587
        %v589 = vpop.xlane.xlu0 %588
        %v590 = vsel %vm303, %v568, 0.0
        %591 = vadd.xlane.f32.xlu0 %v590
        %v592 = vpop.xlane.xlu0 %591
        %v593 = vsel %vm303, %v569, 0.0
        %594 = vadd.xlane.f32.xlu0 %v593
        %v595 = vpop.xlane.xlu0 %594
        %v596 = vsel %vm303, %v570, 0.0
        %597 = vadd.xlane.f32.xlu0 %v596
        %v598 = vpop.xlane.xlu0 %597
        %v599 = vsel %vm303, %v571, 0.0
        %600 = vadd.xlane.f32.xlu0 %v599
        %v601 = vpop.xlane.xlu0 %600
        %v602 = vsel %vm303, %v572, 0.0
        %603 = vadd.xlane.f32.xlu0 %v602
        %v604 = vpop.xlane.xlu0 %603
        %v605 = vsel %vm303, %v573, 0.0
        %606 = vadd.xlane.f32.xlu0 %v605
        %v607 = vpop.xlane.xlu0 %606
        %v608 = vsel %vm303, %v574, 0.0
        %609 = vadd.xlane.f32.xlu0 %v608
        %v610 = vpop.xlane.xlu0 %609
        %v611 = vsel %vm303, %v575, 0.0
        %612 = vadd.xlane.f32.xlu0 %v611
        %v613 = vpop.xlane.xlu0 %612
        %v614 = vsel %vm303, %v576, 0.0
        %615 = vadd.xlane.f32.xlu0 %v614
        %v616 = vpop.xlane.xlu0 %615
        %v617 = vsel %vm303, %v577, 0.0
        %618 = vadd.xlane.f32.xlu0 %v617
        %v619 = vpop.xlane.xlu0 %618
        %v620 = vsel %vm303, %v578, 0.0
        %621 = vadd.xlane.f32.xlu0 %v620
        %v622 = vpop.xlane.xlu0 %621
        %v623 = vsel %vm303, %v579, 0.0
        %624 = vadd.xlane.f32.xlu0 %v623
        %v625 = vpop.xlane.xlu0 %624
        %v626 = vsel %vm303, %v580, 0.0
        %627 = vadd.xlane.f32.xlu0 %v626
        %v628 = vpop.xlane.xlu0 %627
        %v645 = vlaneseq
        %v646 = vand.u32 %v645, 127
        %v647 = vlaneseq
        %v648 = vshrl.u32 %v647, 7
        %v649 = vsub.s32 %v646, %v648
        %v650 = vrot.slane %v583, %v649
        %v651 = vlaneseq
        %v652 = vshrl.u32 %v651, 7
        %v653 = vsub.s32 %v646, %v652
        %v654 = vrot.slane %v586, %v653
        %v655 = vlaneseq
        %v656 = vshrl.u32 %v655, 7
        %v657 = vsub.s32 %v646, %v656
        %v658 = vrot.slane %v589, %v657
        %v659 = vlaneseq
        %v660 = vshrl.u32 %v659, 7
        %v661 = vsub.s32 %v646, %v660
        %v662 = vrot.slane %v592, %v661
        %v663 = vlaneseq
        %v664 = vshrl.u32 %v663, 7
        %v665 = vsub.s32 %v646, %v664
        %v666 = vrot.slane %v595, %v665
        %v667 = vlaneseq
        %v668 = vshrl.u32 %v667, 7
        %v669 = vsub.s32 %v646, %v668
        %v670 = vrot.slane %v598, %v669
        %v671 = vlaneseq
        %v672 = vshrl.u32 %v671, 7
        %v673 = vsub.s32 %v646, %v672
        %v674 = vrot.slane %v601, %v673
        %v675 = vlaneseq
        %v676 = vshrl.u32 %v675, 7
        %v677 = vsub.s32 %v646, %v676
        %v678 = vrot.slane %v604, %v677
        %v679 = vlaneseq
        %v680 = vshrl.u32 %v679, 7
        %v681 = vsub.s32 %v646, %v680
        %v682 = vrot.slane %v607, %v681
        %v683 = vlaneseq
        %v684 = vshrl.u32 %v683, 7
        %v685 = vsub.s32 %v646, %v684
        %v686 = vrot.slane %v610, %v685
        %v687 = vlaneseq
        %v688 = vshrl.u32 %v687, 7
        %v689 = vsub.s32 %v646, %v688
        %v690 = vrot.slane %v613, %v689
        %v691 = vlaneseq
        %v692 = vshrl.u32 %v691, 7
        %v693 = vsub.s32 %v646, %v692
        %v694 = vrot.slane %v616, %v693
        %v695 = vlaneseq
        %v696 = vshrl.u32 %v695, 7
        %v697 = vsub.s32 %v646, %v696
        %v698 = vrot.slane %v619, %v697
        %v699 = vlaneseq
        %v700 = vshrl.u32 %v699, 7
        %v701 = vsub.s32 %v646, %v700
        %v702 = vrot.slane %v622, %v701
        %v703 = vlaneseq
        %v704 = vshrl.u32 %v703, 7
        %v705 = vsub.s32 %v646, %v704
        %v706 = vrot.slane %v625, %v705
        %v707 = vlaneseq
        %v708 = vshrl.u32 %v707, 7
        %v709 = vsub.s32 %v646, %v708
        %v710 = vrot.slane %v628, %v709
        %vm711 = vcmask 1041409
        %v712 = vsel %vm711, %v654, %v650
        %vm713 = vcmask 1042434
        %v714 = vsel %vm713, %v658, %v712
        %vm715 = vcmask 1043459
        %v716 = vsel %vm715, %v662, %v714
        %vm717 = vcmask 1044484
        %v718 = vsel %vm717, %v666, %v716
        %vm719 = vcmask 1045509
        %v720 = vsel %vm719, %v670, %v718
        %vm721 = vcmask 1046534
        %v722 = vsel %vm721, %v674, %v720
        %vm723 = vcmask 1047559
        %v724 = vsel %vm723, %v678, %v722
        %v725 = vsel %vm711, %v686, %v682
        %v726 = vsel %vm713, %v690, %v725
        %v727 = vsel %vm715, %v694, %v726
        %v728 = vsel %vm717, %v698, %v727
        %v729 = vsel %vm719, %v702, %v728
        %v730 = vsel %vm721, %v706, %v729
        %v731 = vsel %vm723, %v710, %v730
        %vm734 = vcmask 64512
        %v735 = vsel %vm734, %v724, -inf
        %736 = vmax.xlane.f32.xlu0 %v735
        %v737 = vpop.xlane.xlu0 %736
        %v738 = vsel %vm734, %v731, -inf
        %739 = vmax.xlane.f32.xlu0 %v738
        %v740 = vpop.xlane.xlu0 %739
        %v743 = vlaneseq
        %v744 = vshrl.u32 %v743, 7
        %v745 = vsub.s32 0, %v744
        %v746 = vrot.slane %v737, %v745
        %v747 = vlaneseq
        %v748 = vshrl.u32 %v747, 7
        %v749 = vsub.s32 1, %v748
        %v750 = vrot.slane %v737, %v749
        %v751 = vlaneseq
        %v752 = vshrl.u32 %v751, 7
        %v753 = vsub.s32 2, %v752
        %v754 = vrot.slane %v737, %v753
        %v755 = vlaneseq
        %v756 = vshrl.u32 %v755, 7
        %v757 = vsub.s32 3, %v756
        %v758 = vrot.slane %v737, %v757
        %v759 = vlaneseq
        %v760 = vshrl.u32 %v759, 7
        %v761 = vsub.s32 4, %v760
        %v762 = vrot.slane %v737, %v761
        %v763 = vlaneseq
        %v764 = vshrl.u32 %v763, 7
        %v765 = vsub.s32 5, %v764
        %v766 = vrot.slane %v737, %v765
        %v767 = vlaneseq
        %v768 = vshrl.u32 %v767, 7
        %v769 = vsub.s32 6, %v768
        %v770 = vrot.slane %v737, %v769
        %v771 = vlaneseq
        %v772 = vshrl.u32 %v771, 7
        %v773 = vsub.s32 7, %v772
        %v774 = vrot.slane %v737, %v773
        %v775 = vlaneseq
        %v776 = vshrl.u32 %v775, 7
        %v777 = vsub.s32 0, %v776
        %v778 = vrot.slane %v740, %v777
        %v779 = vlaneseq
        %v780 = vshrl.u32 %v779, 7
        %v781 = vsub.s32 1, %v780
        %v782 = vrot.slane %v740, %v781
        %v783 = vlaneseq
        %v784 = vshrl.u32 %v783, 7
        %v785 = vsub.s32 2, %v784
        %v786 = vrot.slane %v740, %v785
        %v787 = vlaneseq
        %v788 = vshrl.u32 %v787, 7
        %v789 = vsub.s32 3, %v788
        %v790 = vrot.slane %v740, %v789
        %v791 = vlaneseq
        %v792 = vshrl.u32 %v791, 7
        %v793 = vsub.s32 4, %v792
        %v794 = vrot.slane %v740, %v793
        %v795 = vlaneseq
        %v796 = vshrl.u32 %v795, 7
        %v797 = vsub.s32 5, %v796
        %v798 = vrot.slane %v740, %v797
        %v799 = vlaneseq
        %v800 = vshrl.u32 %v799, 7
        %v801 = vsub.s32 6, %v800
        %v802 = vrot.slane %v740, %v801
        %v803 = vlaneseq
        %v804 = vshrl.u32 %v803, 7
        %v805 = vsub.s32 7, %v804
        %v806 = vrot.slane %v740, %v805
        %v823 = vsub.f32 %v583, %v746
        %v824 = vsub.f32 %v586, %v750
        %v825 = vsub.f32 %v589, %v754
        %v826 = vsub.f32 %v592, %v758
        %v827 = vsub.f32 %v595, %v762
        %v828 = vsub.f32 %v598, %v766
        %v829 = vsub.f32 %v601, %v770
        %v830 = vsub.f32 %v604, %v774
        %v831 = vsub.f32 %v607, %v778
        %v832 = vsub.f32 %v610, %v782
        %v833 = vsub.f32 %v613, %v786
        %v834 = vsub.f32 %v616, %v790
        %v835 = vsub.f32 %v619, %v794
        %v836 = vsub.f32 %v622, %v798
        %v837 = vsub.f32 %v625, %v802
        %v838 = vsub.f32 %v628, %v806
        %v839 = vmul.f32 %v823, 1.442695
        %v840 = vpow.pop %v839
        %v841 = vmul.f32 %v824, 1.442695
        %v842 = vpow.pop %v841
        %v843 = vmul.f32 %v825, 1.442695
        %v844 = vpow.pop %v843
        %v845 = vmul.f32 %v826, 1.442695
        %v846 = vpow.pop %v845
        %v847 = vmul.f32 %v827, 1.442695
        %v848 = vpow.pop %v847
        %v849 = vmul.f32 %v828, 1.442695
        %v850 = vpow.pop %v849
        %v851 = vmul.f32 %v829, 1.442695
        %v852 = vpow.pop %v851
        %v853 = vmul.f32 %v830, 1.442695
        %v854 = vpow.pop %v853
        %v855 = vmul.f32 %v831, 1.442695
        %v856 = vpow.pop %v855
        %v857 = vmul.f32 %v832, 1.442695
        %v858 = vpow.pop %v857
        %v859 = vmul.f32 %v833, 1.442695
        %v860 = vpow.pop %v859
        %v861 = vmul.f32 %v834, 1.442695
        %v862 = vpow.pop %v861
        %v863 = vmul.f32 %v835, 1.442695
        %v864 = vpow.pop %v863
        %v865 = vmul.f32 %v836, 1.442695
        %v866 = vpow.pop %v865
        %v867 = vmul.f32 %v837, 1.442695
        %v868 = vpow.pop %v867
        %v869 = vmul.f32 %v838, 1.442695
        %v870 = vpow.pop %v869
        %887 = vset.pattern.permute.xlu0 0
        %888 = vperm.xlu0 %887, %v840
        %v889 = vpop.permute.xlu0 %888
        %890 = vset.pattern.permute.xlu0 0
        %891 = vperm.xlu0 %890, %v842
        %v892 = vpop.permute.xlu0 %891
        %893 = vset.pattern.permute.xlu0 0
        %894 = vperm.xlu0 %893, %v844
        %v895 = vpop.permute.xlu0 %894
        %896 = vset.pattern.permute.xlu0 0
        %897 = vperm.xlu0 %896, %v846
        %v898 = vpop.permute.xlu0 %897
        %899 = vset.pattern.permute.xlu0 0
        %900 = vperm.xlu0 %899, %v848
        %v901 = vpop.permute.xlu0 %900
        %902 = vset.pattern.permute.xlu0 0
        %903 = vperm.xlu0 %902, %v850
        %v904 = vpop.permute.xlu0 %903
        %905 = vset.pattern.permute.xlu0 0
        %906 = vperm.xlu0 %905, %v852
        %v907 = vpop.permute.xlu0 %906
        %908 = vset.pattern.permute.xlu0 0
        %909 = vperm.xlu0 %908, %v854
        %v910 = vpop.permute.xlu0 %909
        %911 = vset.pattern.permute.xlu0 0
        %912 = vperm.xlu0 %911, %v856
        %v913 = vpop.permute.xlu0 %912
        %914 = vset.pattern.permute.xlu0 0
        %915 = vperm.xlu0 %914, %v858
        %v916 = vpop.permute.xlu0 %915
        %917 = vset.pattern.permute.xlu0 0
        %918 = vperm.xlu0 %917, %v860
        %v919 = vpop.permute.xlu0 %918
        %920 = vset.pattern.permute.xlu0 0
        %921 = vperm.xlu0 %920, %v862
        %v922 = vpop.permute.xlu0 %921
        %923 = vset.pattern.permute.xlu0 0
        %924 = vperm.xlu0 %923, %v864
        %v925 = vpop.permute.xlu0 %924
        %926 = vset.pattern.permute.xlu0 0
        %927 = vperm.xlu0 %926, %v866
        %v928 = vpop.permute.xlu0 %927
        %929 = vset.pattern.permute.xlu0 0
        %930 = vperm.xlu0 %929, %v868
        %v931 = vpop.permute.xlu0 %930
        %932 = vset.pattern.permute.xlu0 0
        %933 = vperm.xlu0 %932, %v870
        %v934 = vpop.permute.xlu0 %933
        %v935 = vlaneseq
        %v936 = vshrl.u32 %v935, 7
        %v937 = vsub.s32 %v646, %v936
        %v938 = vrot.slane %v889, %v937
        %v939 = vlaneseq
        %v940 = vshrl.u32 %v939, 7
        %v941 = vsub.s32 %v646, %v940
        %v942 = vrot.slane %v892, %v941
        %v943 = vlaneseq
        %v944 = vshrl.u32 %v943, 7
        %v945 = vsub.s32 %v646, %v944
        %v946 = vrot.slane %v895, %v945
        %v947 = vlaneseq
        %v948 = vshrl.u32 %v947, 7
        %v949 = vsub.s32 %v646, %v948
        %v950 = vrot.slane %v898, %v949
        %v951 = vlaneseq
        %v952 = vshrl.u32 %v951, 7
        %v953 = vsub.s32 %v646, %v952
        %v954 = vrot.slane %v901, %v953
        %v955 = vlaneseq
        %v956 = vshrl.u32 %v955, 7
        %v957 = vsub.s32 %v646, %v956
        %v958 = vrot.slane %v904, %v957
        %v959 = vlaneseq
        %v960 = vshrl.u32 %v959, 7
        %v961 = vsub.s32 %v646, %v960
        %v962 = vrot.slane %v907, %v961
        %v963 = vlaneseq
        %v964 = vshrl.u32 %v963, 7
        %v965 = vsub.s32 %v646, %v964
        %v966 = vrot.slane %v910, %v965
        %v967 = vlaneseq
        %v968 = vshrl.u32 %v967, 7
        %v969 = vsub.s32 %v646, %v968
        %v970 = vrot.slane %v913, %v969
        %v971 = vlaneseq
        %v972 = vshrl.u32 %v971, 7
        %v973 = vsub.s32 %v646, %v972
        %v974 = vrot.slane %v916, %v973
        %v975 = vlaneseq
        %v976 = vshrl.u32 %v975, 7
        %v977 = vsub.s32 %v646, %v976
        %v978 = vrot.slane %v919, %v977
        %v979 = vlaneseq
        %v980 = vshrl.u32 %v979, 7
        %v981 = vsub.s32 %v646, %v980
        %v982 = vrot.slane %v922, %v981
        %v983 = vlaneseq
        %v984 = vshrl.u32 %v983, 7
        %v985 = vsub.s32 %v646, %v984
        %v986 = vrot.slane %v925, %v985
        %v987 = vlaneseq
        %v988 = vshrl.u32 %v987, 7
        %v989 = vsub.s32 %v646, %v988
        %v990 = vrot.slane %v928, %v989
        %v991 = vlaneseq
        %v992 = vshrl.u32 %v991, 7
        %v993 = vsub.s32 %v646, %v992
        %v994 = vrot.slane %v931, %v993
        %v995 = vlaneseq
        %v996 = vshrl.u32 %v995, 7
        %v997 = vsub.s32 %v646, %v996
        %v998 = vrot.slane %v934, %v997
        %v999 = vsel %vm711, %v942, %v938
        %v1000 = vsel %vm713, %v946, %v999
        %v1001 = vsel %vm715, %v950, %v1000
        %v1002 = vsel %vm717, %v954, %v1001
        %v1003 = vsel %vm719, %v958, %v1002
        %v1004 = vsel %vm721, %v962, %v1003
        %v1005 = vsel %vm723, %v966, %v1004
        %v1006 = vsel %vm711, %v974, %v970
        %v1007 = vsel %vm713, %v978, %v1006
        %v1008 = vsel %vm715, %v982, %v1007
        %v1009 = vsel %vm717, %v986, %v1008
        %v1010 = vsel %vm719, %v990, %v1009
        %v1011 = vsel %vm721, %v994, %v1010
        %v1012 = vsel %vm723, %v998, %v1011
        %v1015 = vsel %vm734, %v1005, 0.0
        %1016 = vadd.xlane.f32.xlu0 %v1015
        %v1017 = vpop.xlane.xlu0 %1016
        %v1018 = vsel %vm734, %v1012, 0.0
        %1019 = vadd.xlane.f32.xlu0 %v1018
        %v1020 = vpop.xlane.xlu0 %1019
        %v1023 = vlaneseq
        %v1024 = vshrl.u32 %v1023, 7
        %v1025 = vsub.s32 0, %v1024
        %v1026 = vrot.slane %v1017, %v1025
        %v1027 = vlaneseq
        %v1028 = vshrl.u32 %v1027, 7
        %v1029 = vsub.s32 1, %v1028
        %v1030 = vrot.slane %v1017, %v1029
        %v1031 = vlaneseq
        %v1032 = vshrl.u32 %v1031, 7
        %v1033 = vsub.s32 2, %v1032
        %v1034 = vrot.slane %v1017, %v1033
        %v1035 = vlaneseq
        %v1036 = vshrl.u32 %v1035, 7
        %v1037 = vsub.s32 3, %v1036
        %v1038 = vrot.slane %v1017, %v1037
        %v1039 = vlaneseq
        %v1040 = vshrl.u32 %v1039, 7
        %v1041 = vsub.s32 4, %v1040
        %v1042 = vrot.slane %v1017, %v1041
        %v1043 = vlaneseq
        %v1044 = vshrl.u32 %v1043, 7
        %v1045 = vsub.s32 5, %v1044
        %v1046 = vrot.slane %v1017, %v1045
        %v1047 = vlaneseq
        %v1048 = vshrl.u32 %v1047, 7
        %v1049 = vsub.s32 6, %v1048
        %v1050 = vrot.slane %v1017, %v1049
        %v1051 = vlaneseq
        %v1052 = vshrl.u32 %v1051, 7
        %v1053 = vsub.s32 7, %v1052
        %v1054 = vrot.slane %v1017, %v1053
        %v1055 = vlaneseq
        %v1056 = vshrl.u32 %v1055, 7
        %v1057 = vsub.s32 0, %v1056
        %v1058 = vrot.slane %v1020, %v1057
        %v1059 = vlaneseq
        %v1060 = vshrl.u32 %v1059, 7
        %v1061 = vsub.s32 1, %v1060
        %v1062 = vrot.slane %v1020, %v1061
        %v1063 = vlaneseq
        %v1064 = vshrl.u32 %v1063, 7
        %v1065 = vsub.s32 2, %v1064
        %v1066 = vrot.slane %v1020, %v1065
        %v1067 = vlaneseq
        %v1068 = vshrl.u32 %v1067, 7
        %v1069 = vsub.s32 3, %v1068
        %v1070 = vrot.slane %v1020, %v1069
        %v1071 = vlaneseq
        %v1072 = vshrl.u32 %v1071, 7
        %v1073 = vsub.s32 4, %v1072
        %v1074 = vrot.slane %v1020, %v1073
        %v1075 = vlaneseq
        %v1076 = vshrl.u32 %v1075, 7
        %v1077 = vsub.s32 5, %v1076
        %v1078 = vrot.slane %v1020, %v1077
        %v1079 = vlaneseq
        %v1080 = vshrl.u32 %v1079, 7
        %v1081 = vsub.s32 6, %v1080
        %v1082 = vrot.slane %v1020, %v1081
        %v1083 = vlaneseq
        %v1084 = vshrl.u32 %v1083, 7
        %v1085 = vsub.s32 7, %v1084
        %v1086 = vrot.slane %v1020, %v1085
        %v1103 = vrcp.pop %v1026
        %v1104 = vmul.f32 %v840, %v1103
        %v1105 = vrcp.pop %v1030
        %v1106 = vmul.f32 %v842, %v1105
        %v1107 = vrcp.pop %v1034
        %v1108 = vmul.f32 %v844, %v1107
        %v1109 = vrcp.pop %v1038
        %v1110 = vmul.f32 %v846, %v1109
        %v1111 = vrcp.pop %v1042
        %v1112 = vmul.f32 %v848, %v1111
        %v1113 = vrcp.pop %v1046
        %v1114 = vmul.f32 %v850, %v1113
        %v1115 = vrcp.pop %v1050
        %v1116 = vmul.f32 %v852, %v1115
        %v1117 = vrcp.pop %v1054
        %v1118 = vmul.f32 %v854, %v1117
        %v1119 = vrcp.pop %v1058
        %v1120 = vmul.f32 %v856, %v1119
        %v1121 = vrcp.pop %v1062
        %v1122 = vmul.f32 %v858, %v1121
        %v1123 = vrcp.pop %v1066
        %v1124 = vmul.f32 %v860, %v1123
        %v1125 = vrcp.pop %v1070
        %v1126 = vmul.f32 %v862, %v1125
        %v1127 = vrcp.pop %v1074
        %v1128 = vmul.f32 %v864, %v1127
        %v1129 = vrcp.pop %v1078
        %v1130 = vmul.f32 %v866, %v1129
        %v1131 = vrcp.pop %v1082
        %v1132 = vmul.f32 %v868, %v1131
        %v1133 = vrcp.pop %v1086
        %v1134 = vmul.f32 %v870, %v1133
        %1136 = vset.pattern.permute.xlu0 0
        %1137 = vperm.xlu0 %1136, %v1104
        %v1138 = vpop.permute.xlu0 %1137
        %1141 = vset.pattern.permute.xlu0 0
        %1142 = vperm.xlu0 %1141, %v1106
        %v1143 = vpop.permute.xlu0 %1142
        %1146 = vset.pattern.permute.xlu0 0
        %1147 = vperm.xlu0 %1146, %v1108
        %v1148 = vpop.permute.xlu0 %1147
        %1151 = vset.pattern.permute.xlu0 0
        %1152 = vperm.xlu0 %1151, %v1110
        %v1153 = vpop.permute.xlu0 %1152
        %1156 = vset.pattern.permute.xlu0 0
        %1157 = vperm.xlu0 %1156, %v1112
        %v1158 = vpop.permute.xlu0 %1157
        %1161 = vset.pattern.permute.xlu0 0
        %1162 = vperm.xlu0 %1161, %v1114
        %v1163 = vpop.permute.xlu0 %1162
        %1166 = vset.pattern.permute.xlu0 0
        %1167 = vperm.xlu0 %1166, %v1116
        %v1168 = vpop.permute.xlu0 %1167
        %1171 = vset.pattern.permute.xlu0 0
        %1172 = vperm.xlu0 %1171, %v1118
        %v1173 = vpop.permute.xlu0 %1172
        %1176 = vset.pattern.permute.xlu0 0
        %1177 = vperm.xlu0 %1176, %v1120
        %v1178 = vpop.permute.xlu0 %1177
        %1181 = vset.pattern.permute.xlu0 0
        %1182 = vperm.xlu0 %1181, %v1122
        %v1183 = vpop.permute.xlu0 %1182
        %1186 = vset.pattern.permute.xlu0 0
        %1187 = vperm.xlu0 %1186, %v1124
        %v1188 = vpop.permute.xlu0 %1187
        %1191 = vset.pattern.permute.xlu0 0
        %1192 = vperm.xlu0 %1191, %v1126
        %v1193 = vpop.permute.xlu0 %1192
        %1196 = vset.pattern.permute.xlu0 0
        %1197 = vperm.xlu0 %1196, %v1128
        %v1198 = vpop.permute.xlu0 %1197
        %1201 = vset.pattern.permute.xlu0 0
        %1202 = vperm.xlu0 %1201, %v1130
        %v1203 = vpop.permute.xlu0 %1202
        %1206 = vset.pattern.permute.xlu0 0
        %1207 = vperm.xlu0 %1206, %v1132
        %v1208 = vpop.permute.xlu0 %1207
        %1211 = vset.pattern.permute.xlu0 0
        %1212 = vperm.xlu0 %1211, %v1134
        %v1213 = vpop.permute.xlu0 %1212
        %v1215 = vmul.f32 %v1138, %v283
        %v1216 = vmul.f32 %v1143, %v284
        %v1217 = vmul.f32 %v1148, %v285
        %v1218 = vmul.f32 %v1153, %v286
        %v1219 = vmul.f32 %v1158, %v287
        %v1220 = vmul.f32 %v1163, %v288
        %v1221 = vmul.f32 %v1168, %v289
        %v1222 = vmul.f32 %v1173, %v290
        %v1223 = vmul.f32 %v1178, %v291
        %v1224 = vmul.f32 %v1183, %v292
        %v1225 = vmul.f32 %v1188, %v293
        %v1226 = vmul.f32 %v1193, %v294
        %v1227 = vmul.f32 %v1198, %v295
        %v1228 = vmul.f32 %v1203, %v296
        %v1229 = vmul.f32 %v1208, %v297
        %v1230 = vmul.f32 %v1213, %v298
        %v1231 = vsel %vm303, %v1215, 0.0
        %v1232 = vrot.slane %v1231, 4
        %v1233 = vadd.f32 %v1231, %v1232
        %v1234 = vrot.slane %v1233, 2
        %v1235 = vadd.f32 %v1233, %v1234
        %v1236 = vrot.slane %v1235, 1
        %v1237 = vadd.f32 %v1235, %v1236
        %v1238 = vsel %vm303, %v1216, 0.0
        %v1239 = vrot.slane %v1238, 4
        %v1240 = vadd.f32 %v1238, %v1239
        %v1241 = vrot.slane %v1240, 2
        %v1242 = vadd.f32 %v1240, %v1241
        %v1243 = vrot.slane %v1242, 1
        %v1244 = vadd.f32 %v1242, %v1243
        %v1245 = vsel %vm303, %v1217, 0.0
        %v1246 = vrot.slane %v1245, 4
        %v1247 = vadd.f32 %v1245, %v1246
        %v1248 = vrot.slane %v1247, 2
        %v1249 = vadd.f32 %v1247, %v1248
        %v1250 = vrot.slane %v1249, 1
        %v1251 = vadd.f32 %v1249, %v1250
        %v1252 = vsel %vm303, %v1218, 0.0
        %v1253 = vrot.slane %v1252, 4
        %v1254 = vadd.f32 %v1252, %v1253
        %v1255 = vrot.slane %v1254, 2
        %v1256 = vadd.f32 %v1254, %v1255
        %v1257 = vrot.slane %v1256, 1
        %v1258 = vadd.f32 %v1256, %v1257
        %v1259 = vsel %vm303, %v1219, 0.0
        %v1260 = vrot.slane %v1259, 4
        %v1261 = vadd.f32 %v1259, %v1260
        %v1262 = vrot.slane %v1261, 2
        %v1263 = vadd.f32 %v1261, %v1262
        %v1264 = vrot.slane %v1263, 1
        %v1265 = vadd.f32 %v1263, %v1264
        %v1266 = vsel %vm303, %v1220, 0.0
        %v1267 = vrot.slane %v1266, 4
        %v1268 = vadd.f32 %v1266, %v1267
        %v1269 = vrot.slane %v1268, 2
        %v1270 = vadd.f32 %v1268, %v1269
        %v1271 = vrot.slane %v1270, 1
        %v1272 = vadd.f32 %v1270, %v1271
        %v1273 = vsel %vm303, %v1221, 0.0
        %v1274 = vrot.slane %v1273, 4
        %v1275 = vadd.f32 %v1273, %v1274
        %v1276 = vrot.slane %v1275, 2
        %v1277 = vadd.f32 %v1275, %v1276
        %v1278 = vrot.slane %v1277, 1
        %v1279 = vadd.f32 %v1277, %v1278
        %v1280 = vsel %vm303, %v1222, 0.0
        %v1281 = vrot.slane %v1280, 4
        %v1282 = vadd.f32 %v1280, %v1281
        %v1283 = vrot.slane %v1282, 2
        %v1284 = vadd.f32 %v1282, %v1283
        %v1285 = vrot.slane %v1284, 1
        %v1286 = vadd.f32 %v1284, %v1285
        %v1287 = vsel %vm303, %v1223, 0.0
        %v1288 = vrot.slane %v1287, 4
        %v1289 = vadd.f32 %v1287, %v1288
        %v1290 = vrot.slane %v1289, 2
        %v1291 = vadd.f32 %v1289, %v1290
        %v1292 = vrot.slane %v1291, 1
        %v1293 = vadd.f32 %v1291, %v1292
        %v1294 = vsel %vm303, %v1224, 0.0
        %v1295 = vrot.slane %v1294, 4
        %v1296 = vadd.f32 %v1294, %v1295
        %v1297 = vrot.slane %v1296, 2
        %v1298 = vadd.f32 %v1296, %v1297
        %v1299 = vrot.slane %v1298, 1
        %v1300 = vadd.f32 %v1298, %v1299
        %v1301 = vsel %vm303, %v1225, 0.0
        %v1302 = vrot.slane %v1301, 4
        %v1303 = vadd.f32 %v1301, %v1302
        %v1304 = vrot.slane %v1303, 2
        %v1305 = vadd.f32 %v1303, %v1304
        %v1306 = vrot.slane %v1305, 1
        %v1307 = vadd.f32 %v1305, %v1306
        %v1308 = vsel %vm303, %v1226, 0.0
        %v1309 = vrot.slane %v1308, 4
        %v1310 = vadd.f32 %v1308, %v1309
        %v1311 = vrot.slane %v1310, 2
        %v1312 = vadd.f32 %v1310, %v1311
        %v1313 = vrot.slane %v1312, 1
        %v1314 = vadd.f32 %v1312, %v1313
        %v1315 = vsel %vm303, %v1227, 0.0
        %v1316 = vrot.slane %v1315, 4
        %v1317 = vadd.f32 %v1315, %v1316
        %v1318 = vrot.slane %v1317, 2
        %v1319 = vadd.f32 %v1317, %v1318
        %v1320 = vrot.slane %v1319, 1
        %v1321 = vadd.f32 %v1319, %v1320
        %v1322 = vsel %vm303, %v1228, 0.0
        %v1323 = vrot.slane %v1322, 4
        %v1324 = vadd.f32 %v1322, %v1323
        %v1325 = vrot.slane %v1324, 2
        %v1326 = vadd.f32 %v1324, %v1325
        %v1327 = vrot.slane %v1326, 1
        %v1328 = vadd.f32 %v1326, %v1327
        %v1329 = vsel %vm303, %v1229, 0.0
        %v1330 = vrot.slane %v1329, 4
        %v1331 = vadd.f32 %v1329, %v1330
        %v1332 = vrot.slane %v1331, 2
        %v1333 = vadd.f32 %v1331, %v1332
        %v1334 = vrot.slane %v1333, 1
        %v1335 = vadd.f32 %v1333, %v1334
        %v1336 = vsel %vm303, %v1230, 0.0
        %v1337 = vrot.slane %v1336, 4
        %v1338 = vadd.f32 %v1336, %v1337
        %v1339 = vrot.slane %v1338, 2
        %v1340 = vadd.f32 %v1338, %v1339
        %v1341 = vrot.slane %v1340, 1
        %v1342 = vadd.f32 %v1340, %v1341
        %v1359 = vsel %vm711, %v1244, %v1237
        %v1360 = vsel %vm713, %v1251, %v1359
        %v1361 = vsel %vm715, %v1258, %v1360
        %v1362 = vsel %vm717, %v1265, %v1361
        %v1363 = vsel %vm719, %v1272, %v1362
        %v1364 = vsel %vm721, %v1279, %v1363
        %v1365 = vsel %vm723, %v1286, %v1364
        %v1366 = vsel %vm711, %v1300, %v1293
        %v1367 = vsel %vm713, %v1307, %v1366
        %v1368 = vsel %vm715, %v1314, %v1367
        %v1369 = vsel %vm717, %v1321, %v1368
        %v1370 = vsel %vm719, %v1328, %v1369
        %v1371 = vsel %vm721, %v1335, %v1370
        %v1372 = vsel %vm723, %v1342, %v1371
        %1375 = vrot.lane.b32.xlu0 %v281, 32
        %v1376 = vpop.permute.xlu0 %1375
        %1377 = vrot.lane.b32.xlu0 %v282, 32
        %v1378 = vpop.permute.xlu0 %1377
        %v1381 = vsel %vm303, %v1365, %v1376
        %v1382 = vsel %vm303, %v1372, %v1378
        %v1383 = vld [vmem:[%s3] sm:$0xff]
        %v1384 = vld [vmem:[%s3 + $0x8] sm:$0xff]
        %v1385 = vld [vmem:[%s3 + $0x10] sm:$0xff]
        %v1386 = vld [vmem:[%s3 + $0x18] sm:$0xff]
        %v1387 = vld [vmem:[%s3 + $0x20] sm:$0xff]
        %v1388 = vld [vmem:[%s3 + $0x28] sm:$0xff]
        %v1389 = vld [vmem:[%s3 + $0x30] sm:$0xff]
        %v1390 = vld [vmem:[%s3 + $0x38] sm:$0xff]
        %vm1391 = vcmask 523264
        %v1393 = vsel %vm1391, %v1381, 0
        %v1396 = vsel %vm1391, %v1382, 0
        %1398 = vmatprep.subr.mxu0 0.0
        %1399 = vmatpush1.msra.mxu0 %v1383
        %1400 = vmatprep.subr.mxu0 0.0
        %1401 = vmatpush1.msra.mxu0 %v1384
        %1402 = vmatprep.subr.mxu0 0.0
        %1403 = vmatpush1.msra.mxu0 %v1385
        %1404 = vmatprep.subr.mxu0 0.0
        %1405 = vmatpush1.msra.mxu0 %v1386
        %1406 = vmatprep.subr.mxu0 0.0
        %1407 = vmatpush1.msra.mxu0 %v1387
        %1408 = vmatprep.subr.mxu0 0.0
        %1409 = vmatpush1.msra.mxu0 %v1388
        %1410 = vmatprep.subr.mxu0 0.0
        %1411 = vmatpush1.msra.mxu0 %v1389
        %1412 = vmatprep.subr.mxu0 0.0
        %1413 = vmatpush1.msra.mxu0 %v1390
        %1414 = vmatprep.subr.mxu0 0.0
        %1415 = vmatpush1.msra.mxu0 0.0
        %1416 = vmatprep.subr.mxu0 0.0
        %1417 = vmatpush1.msra.mxu0 0.0
        %1418 = vmatprep.subr.mxu0 0.0
        %1419 = vmatpush1.msra.mxu0 0.0
        %1420 = vmatprep.subr.mxu0 0.0
        %1421 = vmatpush1.msra.mxu0 0.0
        %1422 = vmatprep.subr.mxu0 0.0
        %1423 = vmatpush1.msra.mxu0 0.0
        %1424 = vmatprep.subr.mxu0 0.0
        %1425 = vmatpush1.msra.mxu0 0.0
        %1426 = vmatprep.subr.mxu0 0.0
        %1427 = vmatpush1.msra.mxu0 0.0
        %1428 = vmatprep.subr.mxu0 0.0
        %1429 = vmatpush1.msra.mxu0 0.0
        %1430 = vmatprep.subr.mxu0 0.0
        %1431 = vmatpush1.msra.mxu0 0.0
        %1432 = vmatprep.subr.mxu0 0.0
        %1433 = vmatpush1.msra.mxu0 0.0
        %1434 = vmatprep.subr.mxu0 0.0
        %1435 = vmatpush1.msra.mxu0 0.0
        %1436 = vmatprep.subr.mxu0 0.0
        %1437 = vmatpush1.msra.mxu0 0.0
        %1438 = vmatprep.subr.mxu0 0.0
        %1439 = vmatpush1.msra.mxu0 0.0
        %1440 = vmatprep.subr.mxu0 0.0
        %1441 = vmatpush1.msra.mxu0 0.0
        %1442 = vmatprep.subr.mxu0 0.0
        %1443 = vmatpush1.msra.mxu0 0.0
        %1444 = vmatprep.subr.mxu0 0.0
        %1445 = vmatpush1.msra.mxu0 0.0
        %1446 = vmatprep.subr.mxu0 0.0
        %1447 = vmatpush1.msra.mxu0 0.0
        %1448 = vmatprep.subr.mxu0 0.0
        %1449 = vmatpush1.msra.mxu0 0.0
        %1450 = vmatprep.subr.mxu0 0.0
        %1451 = vmatpush1.msra.mxu0 0.0
        %1452 = vmatprep.subr.mxu0 0.0
        %1453 = vmatpush1.msra.mxu0 0.0
        %1454 = vmatprep.subr.mxu0 0.0
        %1455 = vmatpush1.msra.mxu0 0.0
        %1456 = vmatprep.subr.mxu0 0.0
        %1457 = vmatpush1.msra.mxu0 0.0
        %1458 = vmatprep.subr.mxu0 0.0
        %1459 = vmatpush1.msra.mxu0 0.0
        %1460 = vmatprep.subr.mxu0 0.0
        %1461 = vmatpush1.msra.mxu0 0.0
        %1462 = vmatprep.mubr.f32.mxu0 0.0
        %1463 = vmatmul.mubr.f32.gmra.mrb[0].mxu0 %v1393
        %v1464 = vpop.f32.mrb[0].mxu0
        %v1465 = vadd.f32 0.0, %v1464
        %v1466 = vpop.f32.mrb[0].mxu0
        %1467 = vmatprep.mubr.f32.mxu0 0.0
        %1468 = vmatmul.mubr.f32.gmra.mrb[0].mxu0 %v1396
        %v1469 = vpop.f32.mrb[0].mxu0
        %v1470 = vadd.f32 0.0, %v1469
        %v1471 = vpop.f32.mrb[0].mxu0
        %1472 = vdwg.mxu0
        %v1473 = vtanh.pop %v1465
        %v1474 = vtanh.pop %v1470
        %1475 = vst.msk [vmem:[%s259] sm:$0xff] %vm303, %v1473
        %1476 = vst.msk [vmem:[%s259 + $0x8] sm:$0xff] %vm303, %v1474
        %v1477 = vlaneseq
        %v1478 = vshrl.u32 %v1477, 7
        %v1479 = vsub.s32 %v646, %v1478
        %v1480 = vrot.slane %v1138, %v1479
        %v1481 = vlaneseq
        %v1482 = vshrl.u32 %v1481, 7
        %v1483 = vsub.s32 %v646, %v1482
        %v1484 = vrot.slane %v1143, %v1483
        %v1485 = vlaneseq
        %v1486 = vshrl.u32 %v1485, 7
        %v1487 = vsub.s32 %v646, %v1486
        %v1488 = vrot.slane %v1148, %v1487
        %v1489 = vlaneseq
        %v1490 = vshrl.u32 %v1489, 7
        %v1491 = vsub.s32 %v646, %v1490
        %v1492 = vrot.slane %v1153, %v1491
        %v1493 = vlaneseq
        %v1494 = vshrl.u32 %v1493, 7
        %v1495 = vsub.s32 %v646, %v1494
        %v1496 = vrot.slane %v1158, %v1495
        %v1497 = vlaneseq
        %v1498 = vshrl.u32 %v1497, 7
        %v1499 = vsub.s32 %v646, %v1498
        %v1500 = vrot.slane %v1163, %v1499
        %v1501 = vlaneseq
        %v1502 = vshrl.u32 %v1501, 7
        %v1503 = vsub.s32 %v646, %v1502
        %v1504 = vrot.slane %v1168, %v1503
        %v1505 = vlaneseq
        %v1506 = vshrl.u32 %v1505, 7
        %v1507 = vsub.s32 %v646, %v1506
        %v1508 = vrot.slane %v1173, %v1507
        %v1509 = vlaneseq
        %v1510 = vshrl.u32 %v1509, 7
        %v1511 = vsub.s32 %v646, %v1510
        %v1512 = vrot.slane %v1178, %v1511
        %v1513 = vlaneseq
        %v1514 = vshrl.u32 %v1513, 7
        %v1515 = vsub.s32 %v646, %v1514
        %v1516 = vrot.slane %v1183, %v1515
        %v1517 = vlaneseq
        %v1518 = vshrl.u32 %v1517, 7
        %v1519 = vsub.s32 %v646, %v1518
        %v1520 = vrot.slane %v1188, %v1519
        %v1521 = vlaneseq
        %v1522 = vshrl.u32 %v1521, 7
        %v1523 = vsub.s32 %v646, %v1522
        %v1524 = vrot.slane %v1193, %v1523
        %v1525 = vlaneseq
        %v1526 = vshrl.u32 %v1525, 7
        %v1527 = vsub.s32 %v646, %v1526
        %v1528 = vrot.slane %v1198, %v1527
        %v1529 = vlaneseq
        %v1530 = vshrl.u32 %v1529, 7
        %v1531 = vsub.s32 %v646, %v1530
        %v1532 = vrot.slane %v1203, %v1531
        %v1533 = vlaneseq
        %v1534 = vshrl.u32 %v1533, 7
        %v1535 = vsub.s32 %v646, %v1534
        %v1536 = vrot.slane %v1208, %v1535
        %v1537 = vlaneseq
        %v1538 = vshrl.u32 %v1537, 7
        %v1539 = vsub.s32 %v646, %v1538
        %v1540 = vrot.slane %v1213, %v1539
        %v1541 = vsel %vm711, %v1484, %v1480
        %v1542 = vsel %vm713, %v1488, %v1541
        %v1543 = vsel %vm715, %v1492, %v1542
        %v1544 = vsel %vm717, %v1496, %v1543
        %v1545 = vsel %vm719, %v1500, %v1544
        %v1546 = vsel %vm721, %v1504, %v1545
        %v1547 = vsel %vm723, %v1508, %v1546
        %v1548 = vsel %vm711, %v1516, %v1512
        %v1549 = vsel %vm713, %v1520, %v1548
        %v1550 = vsel %vm715, %v1524, %v1549
        %v1551 = vsel %vm717, %v1528, %v1550
        %v1552 = vsel %vm719, %v1532, %v1551
        %v1553 = vsel %vm721, %v1536, %v1552
        %v1554 = vsel %vm723, %v1540, %v1553
        %1557 = vst.msk [vmem:[%s279] sm:$0xff] %vm734, %v1547
        %1558 = vst.msk [vmem:[%s279 + $0x8] sm:$0xff] %vm734, %v1554
        %s1559 = sand.u32 %s125, 1
        %s1560 = scalar_lea.sflag [#allocation4], %s1559
        %s1561 = sand.u32 %s125, 1
        %s1562 = smul.addr %s1561, 16
        %s1563 = scalar_lea.vmem [#allocation5], %s1562
        %s1564 = smul.u32 2, %s23
        %p1565 = scmp.lt.s32.totalorder %s1564, 3
        %s1566 = scalar_select %p1565, %s1564, 3
        %s1567 = smul.addr %s1566, 8
        %s1568 = scalar_lea.vmem %s5, %s1567
        // Predicated region
        $region41: #{tpu_custom_call.1} parent=35 // pred_check
          %p1569 = pneg %p135
        $region42: #{tpu_custom_call.1} parent=35 // pred_check_branch
          %1571 = sbr.rel (%p1569) target = $region44
        $region43: #{tpu_custom_call.1} parent=35 // pred_region
          %s1572 = smul.u32 2, %s23
          %s1574 = ssub.s32 256, 256
          %1575 = vsyncadd %s1560, %s1574
          %s1576 = smul.addr %s1572, 128
          %s1577 = scalar_lea.hbm %s4, %s1576
          %s1578 = sshll.u32 %s1563, 4
          %s1579 = int_to_ptr.vmem [resolvable:$true] %s1578
          %1584 = dma.vmem_to_hbm [thread:$0]  %s1579, 256, %s1577, %s1560, 128, 128, 8
        $region44: #{tpu_custom_call.1} parent=35 // pred_fallthru
          _
        // Predicated region
        $region45: #{tpu_custom_call.1} parent=35 // pred_check
          %p1585 = pneg %p161
        $region46: #{tpu_custom_call.1} parent=35 // pred_check_branch
          %1587 = sbr.rel (%p1585) target = $region48
        $region47: #{tpu_custom_call.1} parent=35 // pred_region
          %s1588 = smul.u32 2, %s23
        $region48: #{tpu_custom_call.1} parent=35 // pred_fallthru
          _
      $region36: #{tpu_custom_call.1} parent=5 // pred_fallthru
        _
      %p1589 = scmp.le.s32.totalorder 2, %s18
      // Predicated region
      $region49: #{tpu_custom_call.1} parent=5 // pred_check
        %p1590 = pneg %p1589
      $region50: #{tpu_custom_call.1} parent=5 // pred_check_branch
        %1592 = sbr.rel (%p1590) target = $region52
      $region51: #{tpu_custom_call.1} parent=5 // pred_region
        %s1593 = ssub.s32 %s18, 2
        // Predicated region
        $region53: #{tpu_custom_call.1} parent=51 // pred_check
          %p1594 = pneg %p141
        $region54: #{tpu_custom_call.1} parent=51 // pred_check_branch
          %1596 = sbr.rel (%p1594) target = $region56
        $region55: #{tpu_custom_call.1} parent=51 // pred_region
          %s1597 = sand.u32 %s126, 1
          %s1598 = scalar_lea.sflag [#allocation4], %s1597
          %s1599 = sand.u32 %s126, 1
          %s1600 = smul.addr %s1599, 16
          %s1601 = scalar_lea.vmem [#allocation5], %s1600
          %1602 = dma.done %s1598, 256
        $region56: #{tpu_custom_call.1} parent=51 // pred_fallthru
          _
        // Predicated region
        $region57: #{tpu_custom_call.1} parent=51 // pred_check
          %p1603 = pneg %p167
        $region58: #{tpu_custom_call.1} parent=51 // pred_check_branch
          %1605 = sbr.rel (%p1603) target = $region60
        $region59: #{tpu_custom_call.1} parent=51 // pred_region
          %s1606 = smul.u32 2, %s24
          %p1607 = scmp.lt.s32.totalorder %s1606, 3
          %s1608 = scalar_select %p1607, %s1606, 3
          %s1609 = smul.addr %s1608, 8
          %s1610 = scalar_lea.vmem %s5, %s1609
        $region60: #{tpu_custom_call.1} parent=51 // pred_fallthru
          _
      $region52: #{tpu_custom_call.1} parent=5 // pred_fallthru
        _
    $region6: #{tpu_custom_call.1} parent=1 // loop_footer
      %s22 = sadd.s32 1, %s18
    $region7: #{tpu_custom_call.1} parent=1 // loop_footer_branch
      %17 = sbr.rel target = $region3
    $region8: #{tpu_custom_call.1} parent=1 // loop_exit
      _
    %1611 = vsyncpa [#allocation3], 1
    %s1612 = scalar_lea.sflag [#allocation3], 1
    %1613 = vsyncpa %s1612, 1
    %1614 = vsyncpa [#allocation4], 1
    %s1615 = scalar_lea.sflag [#allocation4], 1
    %1616 = vsyncpa %s1615, 1

</llo_original>
